<compile_context>
chip_gen: v7x
topology: tpu7x:2x2x1
jax: 0.10.0
libtpu: 0.0.40
codegen_flags: <defaults>
</compile_context>

<pallas_src>
import jax
import jax.numpy as jnp
from jax.experimental import pallas as pl
from jax.experimental.pallas import tpu as pltpu


def _atten_kernel(u_ref, m_ref, w1t_ref, b1_ref, w2t_ref, b2_ref, w3_ref,
                  uatt_ref, wts_ref):
    # u_ref:   (TB, N, D)  block of u_t
    # m_ref:   (TB, D)     block of m_u
    # w1t/w2t: (D, D)      pre-transposed fc1/fc2 weights (grid-invariant)
    # b1/b2:   (1, D)
    # w3:      (1, D)      fc3 weight row (bias dropped: softmax shift-invariant)
    # uatt_ref: (TB, D) output, wts_ref: (TB, N) output (lane-dense)
    tb, n, d = u_ref.shape
    f32 = jnp.float32

    u = u_ref[...]                                            # (TB, N, D)
    m = m_ref[...]                                            # (TB, D)

    # embedding_1: tanh(fc1(u_t)) on all TB*N token rows in one MXU matmul.
    # (Dropout is identity in eval mode.)
    W_u = jnp.tanh(
        jnp.dot(u.reshape(tb * n, d), w1t_ref[...],
                preferred_element_type=f32) + b1_ref[...]
    ).reshape(tb, n, d)                                       # (TB, N, D) f32

    # embedding_2 with fc3 folded in:
    #   v[b, d] = tanh(fc2(m_u))[b, d] * w3[d]
    #   logits[b, i] = sum_d W_u[b, i, d] * v[b, d]
    # This removes the full (TB, N, D) h_u product (exact rewrite).
    v = jnp.tanh(
        jnp.dot(m, w2t_ref[...], preferred_element_type=f32) + b2_ref[...]
    ) * w3_ref[...]                                           # (TB, D) f32

    logits = jnp.sum(W_u * v[:, None, :], axis=-1)            # (TB, N)

    # softmax over the token (lane) axis, batch on sublanes.
    mx = jnp.max(logits, axis=-1, keepdims=True)              # (TB, 1)
    e = jnp.exp(logits - mx)
    denom = jnp.sum(e, axis=-1, keepdims=True)
    # Exact divide (pl.reciprocal(denom, approx=True) is a few-% EUP win where
    # VALU-bound, at the cost of ~1e-4 relative error in the weights).
    wts = e / denom                                           # (TB, N) f32

    # attention-weighted token sum on the MXU: (TB,1,N) @ (TB,N,D) -> (TB,1,D)
    u_att = jnp.einsum(
        'bqn,bnd->bqd', wts[:, None, :], u.astype(f32),
        preferred_element_type=f32)[:, 0, :]                  # (TB, D) f32

    # l2norm along feature dim: x / (sqrt(sum(x^2) + eps) + eps)
    eps = 1e-8
    norm = jnp.sqrt(jnp.sum(u_att * u_att, axis=-1, keepdims=True) + eps) + eps
    uatt_ref[...] = (u_att / norm).astype(uatt_ref.dtype)
    wts_ref[...] = wts.astype(wts_ref.dtype)


def _round_up(x, m):
    return ((x + m - 1) // m) * m


def _vmem_capacity_bytes(default=64 * 1024 * 1024):
    try:
        info = pltpu.get_tpu_info()
        return int(getattr(info, "vmem_capacity_bytes", default))
    except Exception:
        return default


def _pick_tb(B, N, D, in_itemsize, vmem_limit_bytes):
    """Budget-driven batch-block size (multiple of 8)."""
    row_bytes_in = N * D * in_itemsize        # one batch row of u_t (HBM dtype)
    row_bytes_f32 = N * D * 4                 # one batch row of f32 intermediates

    # Target >= ~2 MiB of u_t per grid step to amortize per-step overhead.
    target = 2 * 1024 * 1024
    tb = max(8, (target // max(row_bytes_in, 1)) // 8 * 8)

    # VMEM cap: double-buffered u_t block + ~2x (TB,N,D) f32 live intermediates
    # must stay comfortably inside the scoped VMEM limit (weights are small).
    budget = int(vmem_limit_bytes * 0.6)
    per_row_live = 2 * row_bytes_in + 2 * row_bytes_f32
    tb_cap = max(8, (budget // max(per_row_live, 1)) // 8 * 8)
    tb = min(tb, tb_cap)

    # Never exceed the (8-rounded) batch.
    tb = min(tb, _round_up(B, 8))

    # Keep the grid length >= 2 so the "parallel" batch axis can shard across
    # both TensorCores on v7x (irrelevant on single-TC v5e/v6e).
    if B > 8:
        tb = min(tb, max(8, _round_up((B + 1) // 2, 8)))

    # Prefer a TB that divides B exactly (keeps every block full-sized).
    if B % 8 == 0:
        t = tb
        while t > 8 and B % t:
            t -= 8
        if B % t == 0:
            tb = t
    return tb


def t_single_modal_atten(u_t, m_u, params, *, block_b=None):
    """u_t: (B, N, D), m_u: (B, D) -> (u_att (B, D), weights (B, N))."""
    B, N, D = u_t.shape
    w1, b1, w2, b2, w3, b3 = (params[k] for k in ("w1", "b1", "w2", "b2", "w3", "b3"))
    del b3  # softmax is shift-invariant -> fc3 bias cannot affect either output.

    # glue (plain XLA): pre-transpose weights, reshape biases to 2-D rows.
    w1t = jnp.asarray(w1.T)                  # (D, D)
    w2t = jnp.asarray(w2.T)                  # (D, D)
    b1r = b1.reshape(1, D)
    b2r = b2.reshape(1, D)
    w3r = w3.reshape(1, D)

    # Scoped-VMEM limit: ~75% of physical (v5e/v6e default scoped limit is only
    # 16/32 MiB; v7x physical is 64 MiB so the same fraction keeps headroom).
    vmem_limit = min(int(_vmem_capacity_bytes() * 0.75), 100 * 1024 * 1024)

    if block_b is None:
        TB = _pick_tb(B, N, D, u_t.dtype.itemsize, vmem_limit)
    else:
        TB = max(8, (int(block_b) // 8) * 8)

    # No padded HBM copy: partial last block on the leading batch axis.  All
    # reductions are per-row, so tail garbage only touches rows that are never
    # written back.
    grid = (pl.cdiv(B, TB),)
    out_dtype = u_t.dtype

    grid_spec = pltpu.PrefetchScalarGridSpec(
        num_scalar_prefetch=0,
        grid=grid,
        in_specs=[
            pl.BlockSpec((TB, N, D), lambda b: (b, 0, 0)),   # u_t block
            pl.BlockSpec((TB, D), lambda b: (b, 0)),         # m_u block
            # Grid-invariant weight blocks (revisited every step).  On 64 MiB
            # parts they could be single-buffered (pipeline_mode=pl.Buffered(1))
            # to free VMEM for a larger TB; left default-buffered here.
            pl.BlockSpec((D, D), lambda b: (0, 0)),          # w1t
            pl.BlockSpec((1, D), lambda b: (0, 0)),          # b1
            pl.BlockSpec((D, D), lambda b: (0, 0)),          # w2t
            pl.BlockSpec((1, D), lambda b: (0, 0)),          # b2
            pl.BlockSpec((1, D), lambda b: (0, 0)),          # w3
        ],
        out_specs=[
            pl.BlockSpec((TB, D), lambda b: (b, 0)),         # u_att (B, D)
            pl.BlockSpec((TB, N), lambda b: (b, 0)),         # weights (B, N), lane-dense
        ],
    )

    u_att, wts = pl.pallas_call(
        _atten_kernel,
        out_shape=(
            jax.ShapeDtypeStruct((B, D), out_dtype),
            jax.ShapeDtypeStruct((B, N), out_dtype),
        ),
        grid_spec=grid_spec,
        compiler_params=pltpu.CompilerParams(
            dimension_semantics=("parallel",),
            vmem_limit_bytes=vmem_limit),
    )(u_t, m_u, w1t, b1r, w2t, b2r, w3r)

    return u_att, wts


def _reference(u_t, m_u, params):
    """Pure-JAX reference mirroring the PyTorch forward (eval mode)."""
    w1, b1, w2, b2, w3, b3 = (params[k] for k in ("w1", "b1", "w2", "b2", "w3", "b3"))
    W_u = jnp.tanh(jnp.einsum("bnd,ed->bne", u_t, w1) + b1)
    W_u_m = jnp.tanh(jnp.einsum("bd,ed->be", m_u, w2) + b2)
    h_u = W_u * W_u_m[:, None, :]
    a_u = jnp.einsum("bnd,od->bno", h_u, w3)[..., 0] + b3[0]
    weights = jax.nn.softmax(a_u, axis=1)
    u_att = jnp.sum(weights[:, :, None] * u_t, axis=1)
    norm = jnp.sqrt(jnp.sum(u_att ** 2, axis=-1, keepdims=True) + 1e-8) + 1e-8
    return u_att / norm, weights


if __name__ == "__main__":
    B, N, D = 2, 8, 32  # batch, num tokens, embed_dim

    key = jax.random.PRNGKey(0)
    k_ut, k_mu, k1, k2, k3, k4, k5, k6 = jax.random.split(key, 8)

    u_t = jax.random.normal(k_ut, (B, N, D), dtype=jnp.float32)
    m_u = jax.random.normal(k_mu, (B, D), dtype=jnp.float32)

    # deterministic parameter init (shapes match nn.Linear: weight (out, in), bias (out,))
    params = {
        "w1": 0.1 * jax.random.normal(k1, (D, D), dtype=jnp.float32),
        "b1": 0.1 * jax.random.normal(k2, (D,), dtype=jnp.float32),
        "w2": 0.1 * jax.random.normal(k3, (D, D), dtype=jnp.float32),
        "b2": 0.1 * jax.random.normal(k4, (D,), dtype=jnp.float32),
        "w3": 0.1 * jax.random.normal(k5, (1, D), dtype=jnp.float32),
        "b3": 0.1 * jax.random.normal(k6, (1,), dtype=jnp.float32),
    }

    u_att, weights = t_single_modal_atten(u_t, m_u, params)
    jax.block_until_ready((u_att, weights))

    u_att_ref, weights_ref = _reference(u_t, m_u, params)
    assert u_att.shape == (B, D) and weights.shape == (B, N)
    assert jnp.allclose(u_att, u_att_ref, atol=1e-5, rtol=1e-5)
    assert jnp.allclose(weights, weights_ref, atol=1e-5, rtol=1e-5)

    print("KERNEL_OK")
</pallas_src>

<mosaic_0001>
module attributes {stable_mosaic.version = 11 : i64} {
  func.func @_atten_kernel(%arg0: i32, %arg1: memref<8x8x32xf32, #tpu.memory_space<vmem>>, %arg2: memref<8x32xf32, #tpu.memory_space<vmem>>, %arg3: memref<32x32xf32, #tpu.memory_space<vmem>>, %arg4: memref<1x32xf32, #tpu.memory_space<vmem>>, %arg5: memref<32x32xf32, #tpu.memory_space<vmem>>, %arg6: memref<1x32xf32, #tpu.memory_space<vmem>>, %arg7: memref<1x32xf32, #tpu.memory_space<vmem>>, %arg8: memref<8x32xf32, #tpu.memory_space<vmem>>, %arg9: memref<8x8xf32, #tpu.memory_space<vmem>>) attributes {dimension_semantics = [#tpu.dimension_semantics<parallel>], iteration_bounds = array<i64: 1>, scalar_prefetch = 0 : i64, scratch_operands = 0 : i64, tpu.core_type = #tpu.core_type<tc>, window_params = [{transform_indices = @transform_0, window_bounds = array<i64: 8, 8, 32>}, {transform_indices = @transform_1, window_bounds = array<i64: 8, 32>}, {pipeline_mode = #tpu.pipeline_mode<synchronous>, transform_indices = @transform_2, window_bounds = array<i64: 32, 32>}, {pipeline_mode = #tpu.pipeline_mode<synchronous>, transform_indices = @transform_3, window_bounds = array<i64: 1, 32>}, {pipeline_mode = #tpu.pipeline_mode<synchronous>, transform_indices = @transform_4, window_bounds = array<i64: 32, 32>}, {pipeline_mode = #tpu.pipeline_mode<synchronous>, transform_indices = @transform_5, window_bounds = array<i64: 1, 32>}, {pipeline_mode = #tpu.pipeline_mode<synchronous>, transform_indices = @transform_6, window_bounds = array<i64: 1, 32>}, {transform_indices = @transform_7, window_bounds = array<i64: 8, 32>}, {transform_indices = @transform_8, window_bounds = array<i64: 8, 8>}]} {
    %c0 = arith.constant 0 : index
    %c0_0 = arith.constant 0 : index
    %c0_1 = arith.constant 0 : index
    %0 = vector.load %arg1[%c0, %c0_0, %c0_1] : memref<8x8x32xf32, #tpu.memory_space<vmem>>, vector<8x8x32xf32>
    %c0_2 = arith.constant 0 : index
    %c0_3 = arith.constant 0 : index
    %1 = vector.load %arg2[%c0_2, %c0_3] : memref<8x32xf32, #tpu.memory_space<vmem>>, vector<8x32xf32>
    %2 = vector.shape_cast %0 : vector<8x8x32xf32> to vector<64x32xf32>
    %c0_4 = arith.constant 0 : index
    %c0_5 = arith.constant 0 : index
    %3 = vector.load %arg3[%c0_4, %c0_5] : memref<32x32xf32, #tpu.memory_space<vmem>>, vector<32x32xf32>
    %cst = arith.constant dense<0.000000e+00> : vector<64x32xf32>
    %4 = tpu.matmul %2, %3, %cst {dimension_numbers = #tpu.dot_dimension_numbers<[1], [0], [0], [1], [0, 0, 1, 1], [], []>} : vector<64x32xf32>, vector<32x32xf32>, vector<64x32xf32> -> vector<64x32xf32>
    %c0_6 = arith.constant 0 : index
    %c0_7 = arith.constant 0 : index
    %5 = vector.load %arg4[%c0_6, %c0_7] : memref<1x32xf32, #tpu.memory_space<vmem>>, vector<1x32xf32>
    %6 = vector.broadcast %5 : vector<1x32xf32> to vector<64x32xf32>
    %7 = arith.addf %4, %6 : vector<64x32xf32>
    %8 = math.tanh %7 : vector<64x32xf32>
    %9 = vector.shape_cast %8 : vector<64x32xf32> to vector<8x8x32xf32>
    %c0_8 = arith.constant 0 : index
    %c0_9 = arith.constant 0 : index
    %10 = vector.load %arg5[%c0_8, %c0_9] : memref<32x32xf32, #tpu.memory_space<vmem>>, vector<32x32xf32>
    %cst_10 = arith.constant dense<0.000000e+00> : vector<8x32xf32>
    %11 = tpu.matmul %1, %10, %cst_10 {dimension_numbers = #tpu.dot_dimension_numbers<[1], [0], [0], [1], [0, 0, 1, 1], [], []>} : vector<8x32xf32>, vector<32x32xf32>, vector<8x32xf32> -> vector<8x32xf32>
    %c0_11 = arith.constant 0 : index
    %c0_12 = arith.constant 0 : index
    %12 = vector.load %arg6[%c0_11, %c0_12] : memref<1x32xf32, #tpu.memory_space<vmem>>, vector<1x32xf32>
    %13 = vector.broadcast %12 : vector<1x32xf32> to vector<8x32xf32>
    %14 = arith.addf %11, %13 : vector<8x32xf32>
    %15 = math.tanh %14 : vector<8x32xf32>
    %c0_13 = arith.constant 0 : index
    %c0_14 = arith.constant 0 : index
    %16 = vector.load %arg7[%c0_13, %c0_14] : memref<1x32xf32, #tpu.memory_space<vmem>>, vector<1x32xf32>
    %17 = vector.broadcast %16 : vector<1x32xf32> to vector<8x32xf32>
    %18 = arith.mulf %15, %17 : vector<8x32xf32>
    %19 = vector.shape_cast %18 : vector<8x32xf32> to vector<8x1x32xf32>
    %20 = vector.broadcast %19 : vector<8x1x32xf32> to vector<8x8x32xf32>
    %21 = arith.mulf %9, %20 : vector<8x8x32xf32>
    %cst_15 = arith.constant dense<0.000000e+00> : vector<8x8xf32>
    %22 = vector.multi_reduction <add>, %21, %cst_15 [2] : vector<8x8x32xf32> to vector<8x8xf32>
    %cst_16 = arith.constant dense<0xFF800000> : vector<8xf32>
    %23 = vector.multi_reduction <maximumf>, %22, %cst_16 [1] : vector<8x8xf32> to vector<8xf32>
    %24 = vector.shape_cast %23 : vector<8xf32> to vector<8x1xf32>
    %25 = vector.broadcast %24 : vector<8x1xf32> to vector<8x8xf32>
    %26 = arith.subf %22, %25 : vector<8x8xf32>
    %27 = math.exp %26 : vector<8x8xf32>
    %cst_17 = arith.constant dense<0.000000e+00> : vector<8xf32>
    %28 = vector.multi_reduction <add>, %27, %cst_17 [1] : vector<8x8xf32> to vector<8xf32>
    %29 = vector.shape_cast %28 : vector<8xf32> to vector<8x1xf32>
    %30 = vector.broadcast %29 : vector<8x1xf32> to vector<8x8xf32>
    %31 = arith.divf %27, %30 : vector<8x8xf32>
    %32 = vector.shape_cast %31 : vector<8x8xf32> to vector<8x1x8xf32>
    "tpu.trace_start"() <{level = 10 : i32, message = "bqn,bnd->bqd"}> : () -> ()
    %cst_18 = arith.constant dense<0.000000e+00> : vector<8x1x32xf32>
    %33 = tpu.matmul %32, %0, %cst_18 {dimension_numbers = #tpu.dot_dimension_numbers<[2], [1], [1], [2], [0, 0, 0, 1, 1, 2], [0], [0]>} : vector<8x1x8xf32>, vector<8x8x32xf32>, vector<8x1x32xf32> -> vector<8x1x32xf32>
    "tpu.trace_stop"() : () -> ()
    %34 = vector.shape_cast %33 : vector<8x1x32xf32> to vector<8x32xf32>
    %35 = arith.mulf %34, %34 : vector<8x32xf32>
    %cst_19 = arith.constant dense<0.000000e+00> : vector<8xf32>
    %36 = vector.multi_reduction <add>, %35, %cst_19 [1] : vector<8x32xf32> to vector<8xf32>
    %37 = vector.shape_cast %36 : vector<8xf32> to vector<8x1xf32>
    %cst_20 = arith.constant 9.99999993E-9 : f32
    %38 = vector.broadcast %cst_20 : f32 to vector<8x1xf32>
    %39 = arith.addf %37, %38 : vector<8x1xf32>
    %40 = math.sqrt %39 : vector<8x1xf32>
    %cst_21 = arith.constant 9.99999993E-9 : f32
    %41 = vector.broadcast %cst_21 : f32 to vector<8x1xf32>
    %42 = arith.addf %40, %41 : vector<8x1xf32>
    %43 = vector.broadcast %42 : vector<8x1xf32> to vector<8x32xf32>
    %44 = arith.divf %34, %43 : vector<8x32xf32>
    %c0_22 = arith.constant 0 : index
    %c0_23 = arith.constant 0 : index
    %45 = vector.load %arg8[%c0_22, %c0_23] : memref<8x32xf32, #tpu.memory_space<vmem>>, vector<8x32xf32>
    tpu.vector_store %arg8[%c0_22, %c0_23], %44 {strides = array<i32>} : memref<8x32xf32, #tpu.memory_space<vmem>>, vector<8x32xf32>,
    %c0_24 = arith.constant 0 : index
    %c0_25 = arith.constant 0 : index
    %46 = vector.load %arg9[%c0_24, %c0_25] : memref<8x8xf32, #tpu.memory_space<vmem>>, vector<8x8xf32>
    tpu.vector_store %arg9[%c0_24, %c0_25], %31 {strides = array<i32>} : memref<8x8xf32, #tpu.memory_space<vmem>>, vector<8x8xf32>,
    return
  }
  func.func @transform_0(%arg0: i32) -> (i32, i32, i32) {
    %c0_i32 = arith.constant 0 : i32
    %c0_i32_0 = arith.constant 0 : i32
    %c0_i32_1 = arith.constant 0 : i32
    return %arg0, %c0_i32, %c0_i32_0 : i32, i32, i32
  }
  func.func @transform_1(%arg0: i32) -> (i32, i32) {
    %c0_i32 = arith.constant 0 : i32
    %c0_i32_0 = arith.constant 0 : i32
    return %arg0, %c0_i32 : i32, i32
  }
  func.func @transform_2(%arg0: i32) -> (i32, i32) {
    %c0_i32 = arith.constant 0 : i32
    %c0_i32_0 = arith.constant 0 : i32
    %c0_i32_1 = arith.constant 0 : i32
    return %c0_i32, %c0_i32_0 : i32, i32
  }
  func.func @transform_3(%arg0: i32) -> (i32, i32) {
    %c0_i32 = arith.constant 0 : i32
    %c0_i32_0 = arith.constant 0 : i32
    %c0_i32_1 = arith.constant 0 : i32
    return %c0_i32, %c0_i32_0 : i32, i32
  }
  func.func @transform_4(%arg0: i32) -> (i32, i32) {
    %c0_i32 = arith.constant 0 : i32
    %c0_i32_0 = arith.constant 0 : i32
    %c0_i32_1 = arith.constant 0 : i32
    return %c0_i32, %c0_i32_0 : i32, i32
  }
  func.func @transform_5(%arg0: i32) -> (i32, i32) {
    %c0_i32 = arith.constant 0 : i32
    %c0_i32_0 = arith.constant 0 : i32
    %c0_i32_1 = arith.constant 0 : i32
    return %c0_i32, %c0_i32_0 : i32, i32
  }
  func.func @transform_6(%arg0: i32) -> (i32, i32) {
    %c0_i32 = arith.constant 0 : i32
    %c0_i32_0 = arith.constant 0 : i32
    %c0_i32_1 = arith.constant 0 : i32
    return %c0_i32, %c0_i32_0 : i32, i32
  }
  func.func @transform_7(%arg0: i32) -> (i32, i32) {
    %c0_i32 = arith.constant 0 : i32
    %c0_i32_0 = arith.constant 0 : i32
    return %arg0, %c0_i32 : i32, i32
  }
  func.func @transform_8(%arg0: i32) -> (i32, i32) {
    %c0_i32 = arith.constant 0 : i32
    %c0_i32_0 = arith.constant 0 : i32
    return %arg0, %c0_i32 : i32, i32
  }
}

</mosaic_0001>

<llo_original>
// kernel: tpu_custom_call.1
$region0: #{tpu_custom_call.1}
  #allocation0 [shape = 'u32[]', space=smem, size = 0x4, offset = 0x4, fixed_abs, tag = 'smem constant byte address 0x4 - core index']
  #allocation1 [shape = 'u32[144,128]{1,0:T(1,128)}', space=vmem, size = 0x12000, scoped, tag = 'internal scratch']
  %s0 = inlined_call_operand.hbm [shape: f32[2,8,32], index: 0, kind: input, shape index: {}]
  %s1 = inlined_call_operand.vmem [shape: f32[2,32], index: 1, kind: input, shape index: {}]
  %s2 = inlined_call_operand.hbm [shape: f32[32,32], index: 2, kind: input, shape index: {}]
  %s3 = inlined_call_operand.vmem [shape: f32[1,32], index: 3, kind: input, shape index: {}]
  %s4 = inlined_call_operand.hbm [shape: f32[32,32], index: 4, kind: input, shape index: {}]
  %s5 = inlined_call_operand.vmem [shape: f32[1,32], index: 5, kind: input, shape index: {}]
  %s6 = inlined_call_operand.vmem [shape: f32[1,32], index: 6, kind: input, shape index: {}]
  %s7 = inlined_call_operand.hbm [shape: f32[2,32], index: 7, kind: output, shape index: {0}]
  %s8 = inlined_call_operand.hbm [shape: f32[2,8], index: 8, kind: output, shape index: {1}]
  %9 = xla_tuple %s7, %s8
  %s10 = sld [smem:[#allocation0]]
  $region58: #{tpu_custom_call.1} parent=0
    _
  %s12 = ssub.s32 1, %s10
  %s13 = scalar_select 0, %s12, %s10
  $region1: #{tpu_custom_call.1} parent=0
    #allocation2 [shape = 'u8[32768]{0}', space=vmem, size = 0x8000, scoped, tag = 'input window, operand 0, single buffered']
    #allocation3 [shape = 's32[1]{0}', space=sflag, size = 0x4, scoped, tag = 'scoped memory for tpu_custom_call.1']
    #allocation4 [shape = 's32[1]{0}', space=sflag, size = 0x4, scoped, tag = 'scoped memory for tpu_custom_call.1']
    #allocation5 [shape = 'u8[16384]{0}', space=vmem, size = 0x4000, scoped, tag = 'input window, operand 2, single buffered']
    #allocation6 [shape = 's32[1]{0}', space=sflag, size = 0x4, scoped, tag = 'scoped memory for tpu_custom_call.1']
    #allocation7 [shape = 'u8[16384]{0}', space=vmem, size = 0x4000, scoped, tag = 'input window, operand 4, single buffered']
    #allocation8 [shape = 'u8[4096]{0}', space=vmem, size = 0x1000, scoped, tag = 'output window, operand 0, single buffered']
    #allocation9 [shape = 'u8[4096]{0}', space=vmem, size = 0x1000, scoped, tag = 'output window, operand 1, single buffered']
    #allocation10 [shape = 's32[1]{0}', space=sflag, size = 0x4, scoped, tag = 'scoped memory for tpu_custom_call.1']
    %14 = vsyncpa [#allocation3], 0
    %15 = vsyncpa [#allocation6], 0
    %16 = vsyncpa [#allocation4], 0
    %17 = vsyncpa [#allocation10], 0
    // Predicated region
    $region2: #{tpu_custom_call.1} parent=1 // pred_check
      _
    $region3: #{tpu_custom_call.1} parent=1 // pred_check_branch
      %19 = sbr.rel (0) target = $region5
    $region4: #{tpu_custom_call.1} parent=1 // pred_region
      %s21 = ssub.s32 1024, 256
      %22 = vsyncadd [#allocation3], %s21
      %s23 = sshll.u32 [#allocation2], 4
      %s24 = int_to_ptr.vmem [resolvable:$true] %s23
      %29 = dma.hbm_to_vmem [thread:$0]  %s0, 256, %s24, [#allocation3], 128, 128, 8
    $region5: #{tpu_custom_call.1} parent=1 // pred_fallthru
      _
    // Predicated region
    $region6: #{tpu_custom_call.1} parent=1 // pred_check
      _
    $region7: #{tpu_custom_call.1} parent=1 // pred_check_branch
      %31 = sbr.rel (0) target = $region9
    $region8: #{tpu_custom_call.1} parent=1 // pred_region
      _
    $region9: #{tpu_custom_call.1} parent=1 // pred_fallthru
      _
    // Predicated region
    $region10: #{tpu_custom_call.1} parent=1 // pred_check
      _
    $region11: #{tpu_custom_call.1} parent=1 // pred_check_branch
      %33 = sbr.rel (0) target = $region13
    $region12: #{tpu_custom_call.1} parent=1 // pred_region
      %s35 = ssub.s32 512, 512
      %36 = vsyncadd [#allocation6], %s35
      %s37 = sshll.u32 [#allocation5], 4
      %s38 = int_to_ptr.vmem [resolvable:$true] %s37
      %43 = dma.hbm_to_vmem [thread:$0]  %s2, 512, %s38, [#allocation6], 128, 128, 8
    $region13: #{tpu_custom_call.1} parent=1 // pred_fallthru
      _
    // Predicated region
    $region14: #{tpu_custom_call.1} parent=1 // pred_check
      _
    $region15: #{tpu_custom_call.1} parent=1 // pred_check_branch
      %45 = sbr.rel (0) target = $region17
    $region16: #{tpu_custom_call.1} parent=1 // pred_region
      _
    $region17: #{tpu_custom_call.1} parent=1 // pred_fallthru
      _
    // Predicated region
    $region18: #{tpu_custom_call.1} parent=1 // pred_check
      _
    $region19: #{tpu_custom_call.1} parent=1 // pred_check_branch
      %47 = sbr.rel (0) target = $region21
    $region20: #{tpu_custom_call.1} parent=1 // pred_region
      %s49 = ssub.s32 512, 512
      %50 = vsyncadd [#allocation6], %s49
      %s51 = sshll.u32 [#allocation7], 4
      %s52 = int_to_ptr.vmem [resolvable:$true] %s51
      %57 = dma.hbm_to_vmem [thread:$0]  %s4, 512, %s52, [#allocation6], 128, 128, 8
    $region21: #{tpu_custom_call.1} parent=1 // pred_fallthru
      _
    // Predicated region
    $region22: #{tpu_custom_call.1} parent=1 // pred_check
      _
    $region23: #{tpu_custom_call.1} parent=1 // pred_check_branch
      %59 = sbr.rel (0) target = $region25
    $region24: #{tpu_custom_call.1} parent=1 // pred_region
      _
    $region25: #{tpu_custom_call.1} parent=1 // pred_fallthru
      _
    // Predicated region
    $region26: #{tpu_custom_call.1} parent=1 // pred_check
      _
    $region27: #{tpu_custom_call.1} parent=1 // pred_check_branch
      %61 = sbr.rel (0) target = $region29
    $region28: #{tpu_custom_call.1} parent=1 // pred_region
      _
    $region29: #{tpu_custom_call.1} parent=1 // pred_fallthru
      _
    // Predicated region
    $region30: #{tpu_custom_call.1} parent=1 // pred_check
      _
    $region31: #{tpu_custom_call.1} parent=1 // pred_check_branch
      %63 = sbr.rel (0) target = $region33
    $region32: #{tpu_custom_call.1} parent=1 // pred_region
      %64 = dma.done [#allocation3], 1024
    $region33: #{tpu_custom_call.1} parent=1 // pred_fallthru
      _
    // Predicated region
    $region34: #{tpu_custom_call.1} parent=1 // pred_check
      _
    $region35: #{tpu_custom_call.1} parent=1 // pred_check_branch
      %66 = sbr.rel (0) target = $region37
    $region36: #{tpu_custom_call.1} parent=1 // pred_region
      %67 = dma.done [#allocation6], 512
    $region37: #{tpu_custom_call.1} parent=1 // pred_fallthru
      _
    // Predicated region
    $region38: #{tpu_custom_call.1} parent=1 // pred_check
      _
    $region39: #{tpu_custom_call.1} parent=1 // pred_check_branch
      %69 = sbr.rel (0) target = $region41
    $region40: #{tpu_custom_call.1} parent=1 // pred_region
      %70 = dma.done [#allocation6], 512
    $region41: #{tpu_custom_call.1} parent=1 // pred_fallthru
      _
    %v71 = vld [vmem:[#allocation2] sm:$0xff]
    %v72 = vld [vmem:[#allocation2 + $0x8] sm:$0xff]
    %v73 = vld [vmem:[#allocation2 + $0x10] sm:$0xff]
    %v74 = vld [vmem:[#allocation2 + $0x18] sm:$0xff]
    %v75 = vld [vmem:[#allocation2 + $0x20] sm:$0xff]
    %v76 = vld [vmem:[#allocation2 + $0x28] sm:$0xff]
    %v77 = vld [vmem:[#allocation2 + $0x30] sm:$0xff]
    %v78 = vld [vmem:[#allocation2 + $0x38] sm:$0xff]
    %v79 = vld [vmem:[%s1] sm:$0xff]
    %v80 = vld [vmem:[#allocation5] sm:$0xff]
    %v81 = vld [vmem:[#allocation5 + $0x8] sm:$0xff]
    %v82 = vld [vmem:[#allocation5 + $0x10] sm:$0xff]
    %v83 = vld [vmem:[#allocation5 + $0x18] sm:$0xff]
    %v84 = vld [vmem:[%s3] sm:$0x1]
    %v86 = vlaneseq
    %v87 = vshrl.u32 %v86, 7
    %v88 = vsub.s32 0, %v87
    %v89 = vrot.slane %v84, %v88
    %vm91 = vcmask 261120
    %v93 = vsel %vm91, %v71, 0
    %v96 = vsel %vm91, %v72, 0
    %v99 = vsel %vm91, %v73, 0
    %v102 = vsel %vm91, %v74, 0
    %v105 = vsel %vm91, %v75, 0
    %v108 = vsel %vm91, %v76, 0
    %v111 = vsel %vm91, %v77, 0
    %v114 = vsel %vm91, %v78, 0
    %116 = vmatprep.subr.mxu0 0.0
    %117 = vmatpush1.msra.mxu0 %v80
    %118 = vmatprep.subr.mxu0 0.0
    %119 = vmatpush1.msra.mxu0 %v81
    %120 = vmatprep.subr.mxu0 0.0
    %121 = vmatpush1.msra.mxu0 %v82
    %122 = vmatprep.subr.mxu0 0.0
    %123 = vmatpush1.msra.mxu0 %v83
    %124 = vmatprep.subr.mxu0 0.0
    %125 = vmatpush1.msra.mxu0 0.0
    %126 = vmatprep.subr.mxu0 0.0
    %127 = vmatpush1.msra.mxu0 0.0
    %128 = vmatprep.subr.mxu0 0.0
    %129 = vmatpush1.msra.mxu0 0.0
    %130 = vmatprep.subr.mxu0 0.0
    %131 = vmatpush1.msra.mxu0 0.0
    %132 = vmatprep.subr.mxu0 0.0
    %133 = vmatpush1.msra.mxu0 0.0
    %134 = vmatprep.subr.mxu0 0.0
    %135 = vmatpush1.msra.mxu0 0.0
    %136 = vmatprep.subr.mxu0 0.0
    %137 = vmatpush1.msra.mxu0 0.0
    %138 = vmatprep.subr.mxu0 0.0
    %139 = vmatpush1.msra.mxu0 0.0
    %140 = vmatprep.subr.mxu0 0.0
    %141 = vmatpush1.msra.mxu0 0.0
    %142 = vmatprep.subr.mxu0 0.0
    %143 = vmatpush1.msra.mxu0 0.0
    %144 = vmatprep.subr.mxu0 0.0
    %145 = vmatpush1.msra.mxu0 0.0
    %146 = vmatprep.subr.mxu0 0.0
    %147 = vmatpush1.msra.mxu0 0.0
    %148 = vmatprep.subr.mxu0 0.0
    %149 = vmatpush1.msra.mxu0 0.0
    %150 = vmatprep.subr.mxu0 0.0
    %151 = vmatpush1.msra.mxu0 0.0
    %152 = vmatprep.subr.mxu0 0.0
    %153 = vmatpush1.msra.mxu0 0.0
    %154 = vmatprep.subr.mxu0 0.0
    %155 = vmatpush1.msra.mxu0 0.0
    %156 = vmatprep.subr.mxu0 0.0
    %157 = vmatpush1.msra.mxu0 0.0
    %158 = vmatprep.subr.mxu0 0.0
    %159 = vmatpush1.msra.mxu0 0.0
    %160 = vmatprep.subr.mxu0 0.0
    %161 = vmatpush1.msra.mxu0 0.0
    %162 = vmatprep.subr.mxu0 0.0
    %163 = vmatpush1.msra.mxu0 0.0
    %164 = vmatprep.subr.mxu0 0.0
    %165 = vmatpush1.msra.mxu0 0.0
    %166 = vmatprep.subr.mxu0 0.0
    %167 = vmatpush1.msra.mxu0 0.0
    %168 = vmatprep.subr.mxu0 0.0
    %169 = vmatpush1.msra.mxu0 0.0
    %170 = vmatprep.subr.mxu0 0.0
    %171 = vmatpush1.msra.mxu0 0.0
    %172 = vmatprep.subr.mxu0 0.0
    %173 = vmatpush1.msra.mxu0 0.0
    %174 = vmatprep.subr.mxu0 0.0
    %175 = vmatpush1.msra.mxu0 0.0
    %176 = vmatprep.subr.mxu0 0.0
    %177 = vmatpush1.msra.mxu0 0.0
    %178 = vmatprep.subr.mxu0 0.0
    %179 = vmatpush1.msra.mxu0 0.0
    %180 = vmatprep.mubr.f32.mxu0 0.0
    %181 = vmatmul.mubr.f32.gmra.mrb[0].mxu0 %v93
    %v182 = vpop.f32.mrb[0].mxu0
    %v183 = vadd.f32 %v89, %v182
    %v184 = vpop.f32.mrb[0].mxu0
    %185 = vmatprep.mubr.f32.mxu0 0.0
    %186 = vmatmul.mubr.f32.gmra.mrb[0].mxu0 %v96
    %v187 = vpop.f32.mrb[0].mxu0
    %v188 = vadd.f32 %v89, %v187
    %v189 = vpop.f32.mrb[0].mxu0
    %190 = vmatprep.mubr.f32.mxu0 0.0
    %191 = vmatmul.mubr.f32.gmra.mrb[0].mxu0 %v99
    %v192 = vpop.f32.mrb[0].mxu0
    %v193 = vadd.f32 %v89, %v192
    %v194 = vpop.f32.mrb[0].mxu0
    %195 = vmatprep.mubr.f32.mxu0 0.0
    %196 = vmatmul.mubr.f32.gmra.mrb[0].mxu0 %v102
    %v197 = vpop.f32.mrb[0].mxu0
    %v198 = vadd.f32 %v89, %v197
    %v199 = vpop.f32.mrb[0].mxu0
    %200 = vmatprep.mubr.f32.mxu0 0.0
    %201 = vmatmul.mubr.f32.gmra.mrb[0].mxu0 %v105
    %v202 = vpop.f32.mrb[0].mxu0
    %v203 = vadd.f32 %v89, %v202
    %v204 = vpop.f32.mrb[0].mxu0
    %205 = vmatprep.mubr.f32.mxu0 0.0
    %206 = vmatmul.mubr.f32.gmra.mrb[0].mxu0 %v108
    %v207 = vpop.f32.mrb[0].mxu0
    %v208 = vadd.f32 %v89, %v207
    %v209 = vpop.f32.mrb[0].mxu0
    %210 = vmatprep.mubr.f32.mxu0 0.0
    %211 = vmatmul.mubr.f32.gmra.mrb[0].mxu0 %v111
    %v212 = vpop.f32.mrb[0].mxu0
    %v213 = vadd.f32 %v89, %v212
    %v214 = vpop.f32.mrb[0].mxu0
    %215 = vmatprep.mubr.f32.mxu0 0.0
    %216 = vmatmul.mubr.f32.gmra.mrb[0].mxu0 %v114
    %v217 = vpop.f32.mrb[0].mxu0
    %v218 = vadd.f32 %v89, %v217
    %v219 = vpop.f32.mrb[0].mxu0
    %220 = vdwg.mxu0
    %v221 = vtanh.pop %v183
    %v222 = vtanh.pop %v188
    %v223 = vtanh.pop %v193
    %v224 = vtanh.pop %v198
    %v225 = vtanh.pop %v203
    %v226 = vtanh.pop %v208
    %v227 = vtanh.pop %v213
    %v228 = vtanh.pop %v218
    %v229 = vld [vmem:[#allocation7] sm:$0xff]
    %v230 = vld [vmem:[#allocation7 + $0x8] sm:$0xff]
    %v231 = vld [vmem:[#allocation7 + $0x10] sm:$0xff]
    %v232 = vld [vmem:[#allocation7 + $0x18] sm:$0xff]
    %v233 = vld [vmem:[%s5] sm:$0x1]
    %v235 = vlaneseq
    %v236 = vshrl.u32 %v235, 7
    %v237 = vsub.s32 0, %v236
    %v238 = vrot.slane %v233, %v237
    %v241 = vsel %vm91, %v79, 0
    %243 = vmatprep.subr.mxu0 0.0
    %244 = vmatpush1.msra.mxu0 %v229
    %245 = vmatprep.subr.mxu0 0.0
    %246 = vmatpush1.msra.mxu0 %v230
    %247 = vmatprep.subr.mxu0 0.0
    %248 = vmatpush1.msra.mxu0 %v231
    %249 = vmatprep.subr.mxu0 0.0
    %250 = vmatpush1.msra.mxu0 %v232
    %251 = vmatprep.subr.mxu0 0.0
    %252 = vmatpush1.msra.mxu0 0.0
    %253 = vmatprep.subr.mxu0 0.0
    %254 = vmatpush1.msra.mxu0 0.0
    %255 = vmatprep.subr.mxu0 0.0
    %256 = vmatpush1.msra.mxu0 0.0
    %257 = vmatprep.subr.mxu0 0.0
    %258 = vmatpush1.msra.mxu0 0.0
    %259 = vmatprep.subr.mxu0 0.0
    %260 = vmatpush1.msra.mxu0 0.0
    %261 = vmatprep.subr.mxu0 0.0
    %262 = vmatpush1.msra.mxu0 0.0
    %263 = vmatprep.subr.mxu0 0.0
    %264 = vmatpush1.msra.mxu0 0.0
    %265 = vmatprep.subr.mxu0 0.0
    %266 = vmatpush1.msra.mxu0 0.0
    %267 = vmatprep.subr.mxu0 0.0
    %268 = vmatpush1.msra.mxu0 0.0
    %269 = vmatprep.subr.mxu0 0.0
    %270 = vmatpush1.msra.mxu0 0.0
    %271 = vmatprep.subr.mxu0 0.0
    %272 = vmatpush1.msra.mxu0 0.0
    %273 = vmatprep.subr.mxu0 0.0
    %274 = vmatpush1.msra.mxu0 0.0
    %275 = vmatprep.subr.mxu0 0.0
    %276 = vmatpush1.msra.mxu0 0.0
    %277 = vmatprep.subr.mxu0 0.0
    %278 = vmatpush1.msra.mxu0 0.0
    %279 = vmatprep.subr.mxu0 0.0
    %280 = vmatpush1.msra.mxu0 0.0
    %281 = vmatprep.subr.mxu0 0.0
    %282 = vmatpush1.msra.mxu0 0.0
    %283 = vmatprep.subr.mxu0 0.0
    %284 = vmatpush1.msra.mxu0 0.0
    %285 = vmatprep.subr.mxu0 0.0
    %286 = vmatpush1.msra.mxu0 0.0
    %287 = vmatprep.subr.mxu0 0.0
    %288 = vmatpush1.msra.mxu0 0.0
    %289 = vmatprep.subr.mxu0 0.0
    %290 = vmatpush1.msra.mxu0 0.0
    %291 = vmatprep.subr.mxu0 0.0
    %292 = vmatpush1.msra.mxu0 0.0
    %293 = vmatprep.subr.mxu0 0.0
    %294 = vmatpush1.msra.mxu0 0.0
    %295 = vmatprep.subr.mxu0 0.0
    %296 = vmatpush1.msra.mxu0 0.0
    %297 = vmatprep.subr.mxu0 0.0
    %298 = vmatpush1.msra.mxu0 0.0
    %299 = vmatprep.subr.mxu0 0.0
    %300 = vmatpush1.msra.mxu0 0.0
    %301 = vmatprep.subr.mxu0 0.0
    %302 = vmatpush1.msra.mxu0 0.0
    %303 = vmatprep.subr.mxu0 0.0
    %304 = vmatpush1.msra.mxu0 0.0
    %305 = vmatprep.subr.mxu0 0.0
    %306 = vmatpush1.msra.mxu0 0.0
    %307 = vmatprep.mubr.f32.mxu0 0.0
    %308 = vmatmul.mubr.f32.gmra.mrb[0].mxu0 %v241
    %v309 = vpop.f32.mrb[0].mxu0
    %v310 = vadd.f32 %v238, %v309
    %v311 = vpop.f32.mrb[0].mxu0
    %312 = vdwg.mxu0
    %v313 = vtanh.pop %v310
    %v314 = vld [vmem:[%s6] sm:$0x1]
    %v316 = vlaneseq
    %v317 = vshrl.u32 %v316, 7
    %v318 = vsub.s32 0, %v317
    %v319 = vrot.slane %v314, %v318
    %v321 = vmul.f32 %v313, %v319
    %v323 = vcombine.high %v321, %v321
    %v325 = vunpack.c.l.s4 1966171168
    %v326 = vunpack.c.0.s8 %v325
    %v327 = vlaneseq
    %v328 = vshrl.u32 %v327, 7
    %v329 = vsub.s32 %v326, %v328
    %v330 = vrot.slane %v321, %v329
    %v332 = vunpack.c.l.s4 1966171168
    %v333 = vunpack.c.0.s8 %v332
    %v334 = vlaneseq
    %v335 = vshrl.u32 %v334, 7
    %v336 = vsub.s32 %v333, %v335
    %v337 = vrot.slane %v323, %v336
    %v338 = vcombine.high %v330, %v330
    %v339 = vcombine.high %v337, %v337
    %v341 = vunpack.c.l.s4 1966171168
    %v342 = vunpack.c.0.s8 %v341
    %v343 = vlaneseq
    %v344 = vshrl.u32 %v343, 7
    %v345 = vsub.s32 %v342, %v344
    %v346 = vrot.slane %v330, %v345
    %v348 = vunpack.c.l.s4 1966171168
    %v349 = vunpack.c.0.s8 %v348
    %v350 = vlaneseq
    %v351 = vshrl.u32 %v350, 7
    %v352 = vsub.s32 %v349, %v351
    %v353 = vrot.slane %v337, %v352
    %v355 = vunpack.c.l.s4 1966171168
    %v356 = vunpack.c.0.s8 %v355
    %v357 = vlaneseq
    %v358 = vshrl.u32 %v357, 7
    %v359 = vsub.s32 %v356, %v358
    %v360 = vrot.slane %v338, %v359
    %v362 = vunpack.c.l.s4 1966171168
    %v363 = vunpack.c.0.s8 %v362
    %v364 = vlaneseq
    %v365 = vshrl.u32 %v364, 7
    %v366 = vsub.s32 %v363, %v365
    %v367 = vrot.slane %v339, %v366
    %v368 = vcombine.high %v346, %v346
    %v369 = vcombine.high %v353, %v353
    %v370 = vcombine.high %v360, %v360
    %v371 = vcombine.high %v367, %v367
    %v372 = vlaneseq
    %v373 = vshrl.u32 %v372, 7
    %v374 = vsub.s32 0, %v373
    %v375 = vrot.slane %v346, %v374
    %v376 = vlaneseq
    %v377 = vshrl.u32 %v376, 7
    %v378 = vsub.s32 0, %v377
    %v379 = vrot.slane %v360, %v378
    %v380 = vlaneseq
    %v381 = vshrl.u32 %v380, 7
    %v382 = vsub.s32 0, %v381
    %v383 = vrot.slane %v368, %v382
    %v384 = vlaneseq
    %v385 = vshrl.u32 %v384, 7
    %v386 = vsub.s32 0, %v385
    %v387 = vrot.slane %v370, %v386
    %v388 = vlaneseq
    %v389 = vshrl.u32 %v388, 7
    %v390 = vsub.s32 0, %v389
    %v391 = vrot.slane %v353, %v390
    %v392 = vlaneseq
    %v393 = vshrl.u32 %v392, 7
    %v394 = vsub.s32 0, %v393
    %v395 = vrot.slane %v367, %v394
    %v396 = vlaneseq
    %v397 = vshrl.u32 %v396, 7
    %v398 = vsub.s32 0, %v397
    %v399 = vrot.slane %v369, %v398
    %v400 = vlaneseq
    %v401 = vshrl.u32 %v400, 7
    %v402 = vsub.s32 0, %v401
    %v403 = vrot.slane %v371, %v402
    %v412 = vmul.f32 %v221, %v375
    %v413 = vmul.f32 %v222, %v379
    %v414 = vmul.f32 %v223, %v383
    %v415 = vmul.f32 %v224, %v387
    %v416 = vmul.f32 %v225, %v391
    %v417 = vmul.f32 %v226, %v395
    %v418 = vmul.f32 %v227, %v399
    %v419 = vmul.f32 %v228, %v403
    %v420 = vsel %vm91, %v412, 0.0
    %421 = vadd.xlane.f32.xlu0 %v420
    %v422 = vpop.xlane.xlu0 %421
    %v423 = vsel %vm91, %v413, 0.0
    %424 = vadd.xlane.f32.xlu0 %v423
    %v425 = vpop.xlane.xlu0 %424
    %v426 = vsel %vm91, %v414, 0.0
    %427 = vadd.xlane.f32.xlu0 %v426
    %v428 = vpop.xlane.xlu0 %427
    %v429 = vsel %vm91, %v415, 0.0
    %430 = vadd.xlane.f32.xlu0 %v429
    %v431 = vpop.xlane.xlu0 %430
    %v432 = vsel %vm91, %v416, 0.0
    %433 = vadd.xlane.f32.xlu0 %v432
    %v434 = vpop.xlane.xlu0 %433
    %v435 = vsel %vm91, %v417, 0.0
    %436 = vadd.xlane.f32.xlu0 %v435
    %v437 = vpop.xlane.xlu0 %436
    %v438 = vsel %vm91, %v418, 0.0
    %439 = vadd.xlane.f32.xlu0 %v438
    %v440 = vpop.xlane.xlu0 %439
    %v441 = vsel %vm91, %v419, 0.0
    %442 = vadd.xlane.f32.xlu0 %v441
    %v443 = vpop.xlane.xlu0 %442
    %v452 = vlaneseq
    %v453 = vand.u32 %v452, 127
    %v454 = vlaneseq
    %v455 = vshrl.u32 %v454, 7
    %v456 = vsub.s32 %v453, %v455
    %v457 = vrot.slane %v422, %v456
    %v458 = vlaneseq
    %v459 = vshrl.u32 %v458, 7
    %v460 = vsub.s32 %v453, %v459
    %v461 = vrot.slane %v425, %v460
    %v462 = vlaneseq
    %v463 = vshrl.u32 %v462, 7
    %v464 = vsub.s32 %v453, %v463
    %v465 = vrot.slane %v428, %v464
    %v466 = vlaneseq
    %v467 = vshrl.u32 %v466, 7
    %v468 = vsub.s32 %v453, %v467
    %v469 = vrot.slane %v431, %v468
    %v470 = vlaneseq
    %v471 = vshrl.u32 %v470, 7
    %v472 = vsub.s32 %v453, %v471
    %v473 = vrot.slane %v434, %v472
    %v474 = vlaneseq
    %v475 = vshrl.u32 %v474, 7
    %v476 = vsub.s32 %v453, %v475
    %v477 = vrot.slane %v437, %v476
    %v478 = vlaneseq
    %v479 = vshrl.u32 %v478, 7
    %v480 = vsub.s32 %v453, %v479
    %v481 = vrot.slane %v440, %v480
    %v482 = vlaneseq
    %v483 = vshrl.u32 %v482, 7
    %v484 = vsub.s32 %v453, %v483
    %v485 = vrot.slane %v443, %v484
    %vm486 = vcmask 1041409
    %v487 = vsel %vm486, %v461, %v457
    %vm488 = vcmask 1042434
    %v489 = vsel %vm488, %v465, %v487
    %vm490 = vcmask 1043459
    %v491 = vsel %vm490, %v469, %v489
    %vm492 = vcmask 1044484
    %v493 = vsel %vm492, %v473, %v491
    %vm494 = vcmask 1045509
    %v495 = vsel %vm494, %v477, %v493
    %vm496 = vcmask 1046534
    %v497 = vsel %vm496, %v481, %v495
    %vm498 = vcmask 1047559
    %v499 = vsel %vm498, %v485, %v497
    %vm501 = vcmask 64512
    %v502 = vsel %vm501, %v499, -inf
    %503 = vmax.xlane.f32.xlu0 %v502
    %v504 = vpop.xlane.xlu0 %503
    %v506 = vlaneseq
    %v507 = vshrl.u32 %v506, 7
    %v508 = vsub.s32 0, %v507
    %v509 = vrot.slane %v504, %v508
    %v510 = vlaneseq
    %v511 = vshrl.u32 %v510, 7
    %v512 = vsub.s32 1, %v511
    %v513 = vrot.slane %v504, %v512
    %v514 = vlaneseq
    %v515 = vshrl.u32 %v514, 7
    %v516 = vsub.s32 2, %v515
    %v517 = vrot.slane %v504, %v516
    %v518 = vlaneseq
    %v519 = vshrl.u32 %v518, 7
    %v520 = vsub.s32 3, %v519
    %v521 = vrot.slane %v504, %v520
    %v522 = vlaneseq
    %v523 = vshrl.u32 %v522, 7
    %v524 = vsub.s32 4, %v523
    %v525 = vrot.slane %v504, %v524
    %v526 = vlaneseq
    %v527 = vshrl.u32 %v526, 7
    %v528 = vsub.s32 5, %v527
    %v529 = vrot.slane %v504, %v528
    %v530 = vlaneseq
    %v531 = vshrl.u32 %v530, 7
    %v532 = vsub.s32 6, %v531
    %v533 = vrot.slane %v504, %v532
    %v534 = vlaneseq
    %v535 = vshrl.u32 %v534, 7
    %v536 = vsub.s32 7, %v535
    %v537 = vrot.slane %v504, %v536
    %v546 = vsub.f32 %v422, %v509
    %v547 = vsub.f32 %v425, %v513
    %v548 = vsub.f32 %v428, %v517
    %v549 = vsub.f32 %v431, %v521
    %v550 = vsub.f32 %v434, %v525
    %v551 = vsub.f32 %v437, %v529
    %v552 = vsub.f32 %v440, %v533
    %v553 = vsub.f32 %v443, %v537
    %v554 = vmul.f32 %v546, 1.442695
    %v555 = vpow.pop %v554
    %v556 = vmul.f32 %v547, 1.442695
    %v557 = vpow.pop %v556
    %v558 = vmul.f32 %v548, 1.442695
    %v559 = vpow.pop %v558
    %v560 = vmul.f32 %v549, 1.442695
    %v561 = vpow.pop %v560
    %v562 = vmul.f32 %v550, 1.442695
    %v563 = vpow.pop %v562
    %v564 = vmul.f32 %v551, 1.442695
    %v565 = vpow.pop %v564
    %v566 = vmul.f32 %v552, 1.442695
    %v567 = vpow.pop %v566
    %v568 = vmul.f32 %v553, 1.442695
    %v569 = vpow.pop %v568
    %578 = vset.pattern.permute.xlu0 0
    %579 = vperm.xlu0 %578, %v555
    %v580 = vpop.permute.xlu0 %579
    %581 = vset.pattern.permute.xlu0 0
    %582 = vperm.xlu0 %581, %v557
    %v583 = vpop.permute.xlu0 %582
    %584 = vset.pattern.permute.xlu0 0
    %585 = vperm.xlu0 %584, %v559
    %v586 = vpop.permute.xlu0 %585
    %587 = vset.pattern.permute.xlu0 0
    %588 = vperm.xlu0 %587, %v561
    %v589 = vpop.permute.xlu0 %588
    %590 = vset.pattern.permute.xlu0 0
    %591 = vperm.xlu0 %590, %v563
    %v592 = vpop.permute.xlu0 %591
    %593 = vset.pattern.permute.xlu0 0
    %594 = vperm.xlu0 %593, %v565
    %v595 = vpop.permute.xlu0 %594
    %596 = vset.pattern.permute.xlu0 0
    %597 = vperm.xlu0 %596, %v567
    %v598 = vpop.permute.xlu0 %597
    %599 = vset.pattern.permute.xlu0 0
    %600 = vperm.xlu0 %599, %v569
    %v601 = vpop.permute.xlu0 %600
    %v602 = vlaneseq
    %v603 = vshrl.u32 %v602, 7
    %v604 = vsub.s32 %v453, %v603
    %v605 = vrot.slane %v580, %v604
    %v606 = vlaneseq
    %v607 = vshrl.u32 %v606, 7
    %v608 = vsub.s32 %v453, %v607
    %v609 = vrot.slane %v583, %v608
    %v610 = vlaneseq
    %v611 = vshrl.u32 %v610, 7
    %v612 = vsub.s32 %v453, %v611
    %v613 = vrot.slane %v586, %v612
    %v614 = vlaneseq
    %v615 = vshrl.u32 %v614, 7
    %v616 = vsub.s32 %v453, %v615
    %v617 = vrot.slane %v589, %v616
    %v618 = vlaneseq
    %v619 = vshrl.u32 %v618, 7
    %v620 = vsub.s32 %v453, %v619
    %v621 = vrot.slane %v592, %v620
    %v622 = vlaneseq
    %v623 = vshrl.u32 %v622, 7
    %v624 = vsub.s32 %v453, %v623
    %v625 = vrot.slane %v595, %v624
    %v626 = vlaneseq
    %v627 = vshrl.u32 %v626, 7
    %v628 = vsub.s32 %v453, %v627
    %v629 = vrot.slane %v598, %v628
    %v630 = vlaneseq
    %v631 = vshrl.u32 %v630, 7
    %v632 = vsub.s32 %v453, %v631
    %v633 = vrot.slane %v601, %v632
    %v634 = vsel %vm486, %v609, %v605
    %v635 = vsel %vm488, %v613, %v634
    %v636 = vsel %vm490, %v617, %v635
    %v637 = vsel %vm492, %v621, %v636
    %v638 = vsel %vm494, %v625, %v637
    %v639 = vsel %vm496, %v629, %v638
    %v640 = vsel %vm498, %v633, %v639
    %v642 = vsel %vm501, %v640, 0.0
    %643 = vadd.xlane.f32.xlu0 %v642
    %v644 = vpop.xlane.xlu0 %643
    %v646 = vlaneseq
    %v647 = vshrl.u32 %v646, 7
    %v648 = vsub.s32 0, %v647
    %v649 = vrot.slane %v644, %v648
    %v650 = vlaneseq
    %v651 = vshrl.u32 %v650, 7
    %v652 = vsub.s32 1, %v651
    %v653 = vrot.slane %v644, %v652
    %v654 = vlaneseq
    %v655 = vshrl.u32 %v654, 7
    %v656 = vsub.s32 2, %v655
    %v657 = vrot.slane %v644, %v656
    %v658 = vlaneseq
    %v659 = vshrl.u32 %v658, 7
    %v660 = vsub.s32 3, %v659
    %v661 = vrot.slane %v644, %v660
    %v662 = vlaneseq
    %v663 = vshrl.u32 %v662, 7
    %v664 = vsub.s32 4, %v663
    %v665 = vrot.slane %v644, %v664
    %v666 = vlaneseq
    %v667 = vshrl.u32 %v666, 7
    %v668 = vsub.s32 5, %v667
    %v669 = vrot.slane %v644, %v668
    %v670 = vlaneseq
    %v671 = vshrl.u32 %v670, 7
    %v672 = vsub.s32 6, %v671
    %v673 = vrot.slane %v644, %v672
    %v674 = vlaneseq
    %v675 = vshrl.u32 %v674, 7
    %v676 = vsub.s32 7, %v675
    %v677 = vrot.slane %v644, %v676
    %v686 = vrcp.pop %v649
    %v687 = vmul.f32 %v555, %v686
    %v688 = vrcp.pop %v653
    %v689 = vmul.f32 %v557, %v688
    %v690 = vrcp.pop %v657
    %v691 = vmul.f32 %v559, %v690
    %v692 = vrcp.pop %v661
    %v693 = vmul.f32 %v561, %v692
    %v694 = vrcp.pop %v665
    %v695 = vmul.f32 %v563, %v694
    %v696 = vrcp.pop %v669
    %v697 = vmul.f32 %v565, %v696
    %v698 = vrcp.pop %v673
    %v699 = vmul.f32 %v567, %v698
    %v700 = vrcp.pop %v677
    %v701 = vmul.f32 %v569, %v700
    %703 = vset.pattern.permute.xlu0 0
    %704 = vperm.xlu0 %703, %v687
    %v705 = vpop.permute.xlu0 %704
    %v706 = vlaneseq
    %v707 = vshrl.u32 %v706, 7
    %v708 = vsub.s32 %v453, %v707
    %v709 = vrot.slane %v705, %v708
    %v710 = vsel %vm501, %v709, 0
    %712 = vmatprep.subr.mxu0 0.0
    %713 = vmatpush1.msra.mxu0 %v71
    %714 = vmatprep.subr.mxu0 0.0
    %715 = vmatpush1.msra.mxu0 0.0
    %716 = vmatprep.subr.mxu0 0.0
    %717 = vmatpush1.msra.mxu0 0.0
    %718 = vmatprep.subr.mxu0 0.0
    %719 = vmatpush1.msra.mxu0 0.0
    %720 = vmatprep.subr.mxu0 0.0
    %721 = vmatpush1.msra.mxu0 0.0
    %722 = vmatprep.subr.mxu0 0.0
    %723 = vmatpush1.msra.mxu0 0.0
    %724 = vmatprep.subr.mxu0 0.0
    %725 = vmatpush1.msra.mxu0 0.0
    %726 = vmatprep.subr.mxu0 0.0
    %727 = vmatpush1.msra.mxu0 0.0
    %728 = vmatprep.subr.mxu0 0.0
    %729 = vmatpush1.msra.mxu0 0.0
    %730 = vmatprep.subr.mxu0 0.0
    %731 = vmatpush1.msra.mxu0 0.0
    %732 = vmatprep.subr.mxu0 0.0
    %733 = vmatpush1.msra.mxu0 0.0
    %734 = vmatprep.subr.mxu0 0.0
    %735 = vmatpush1.msra.mxu0 0.0
    %736 = vmatprep.subr.mxu0 0.0
    %737 = vmatpush1.msra.mxu0 0.0
    %738 = vmatprep.subr.mxu0 0.0
    %739 = vmatpush1.msra.mxu0 0.0
    %740 = vmatprep.subr.mxu0 0.0
    %741 = vmatpush1.msra.mxu0 0.0
    %742 = vmatprep.subr.mxu0 0.0
    %743 = vmatpush1.msra.mxu0 0.0
    %744 = vmatprep.subr.mxu0 0.0
    %745 = vmatpush1.msra.mxu0 0.0
    %746 = vmatprep.subr.mxu0 0.0
    %747 = vmatpush1.msra.mxu0 0.0
    %748 = vmatprep.subr.mxu0 0.0
    %749 = vmatpush1.msra.mxu0 0.0
    %750 = vmatprep.subr.mxu0 0.0
    %751 = vmatpush1.msra.mxu0 0.0
    %752 = vmatprep.subr.mxu0 0.0
    %753 = vmatpush1.msra.mxu0 0.0
    %754 = vmatprep.subr.mxu0 0.0
    %755 = vmatpush1.msra.mxu0 0.0
    %756 = vmatprep.subr.mxu0 0.0
    %757 = vmatpush1.msra.mxu0 0.0
    %758 = vmatprep.subr.mxu0 0.0
    %759 = vmatpush1.msra.mxu0 0.0
    %760 = vmatprep.subr.mxu0 0.0
    %761 = vmatpush1.msra.mxu0 0.0
    %762 = vmatprep.subr.mxu0 0.0
    %763 = vmatpush1.msra.mxu0 0.0
    %764 = vmatprep.subr.mxu0 0.0
    %765 = vmatpush1.msra.mxu0 0.0
    %766 = vmatprep.subr.mxu0 0.0
    %767 = vmatpush1.msra.mxu0 0.0
    %768 = vmatprep.subr.mxu0 0.0
    %769 = vmatpush1.msra.mxu0 0.0
    %770 = vmatprep.subr.mxu0 0.0
    %771 = vmatpush1.msra.mxu0 0.0
    %772 = vmatprep.subr.mxu0 0.0
    %773 = vmatpush1.msra.mxu0 0.0
    %774 = vmatprep.subr.mxu0 0.0
    %775 = vmatpush1.msra.mxu0 0.0
    %776 = vmatprep.mubr.f32.mxu0 0.0
    %777 = vmatmul.mubr.f32.gmra.mrb[0].mxu0 %v710
    %v778 = vpop.f32.mrb[0].mxu0
    %v779 = vadd.f32 0.0, %v778
    %v780 = vpop.f32.mrb[0].mxu0
    %781 = vdwg.mxu0
    %783 = vset.pattern.permute.xlu0 0
    %784 = vperm.xlu0 %783, %v689
    %v785 = vpop.permute.xlu0 %784
    %v786 = vlaneseq
    %v787 = vshrl.u32 %v786, 7
    %v788 = vsub.s32 %v453, %v787
    %v789 = vrot.slane %v785, %v788
    %v790 = vsel %vm501, %v789, 0
    %792 = vmatprep.subr.mxu0 0.0
    %793 = vmatpush1.msra.mxu0 %v72
    %794 = vmatprep.subr.mxu0 0.0
    %795 = vmatpush1.msra.mxu0 0.0
    %796 = vmatprep.subr.mxu0 0.0
    %797 = vmatpush1.msra.mxu0 0.0
    %798 = vmatprep.subr.mxu0 0.0
    %799 = vmatpush1.msra.mxu0 0.0
    %800 = vmatprep.subr.mxu0 0.0
    %801 = vmatpush1.msra.mxu0 0.0
    %802 = vmatprep.subr.mxu0 0.0
    %803 = vmatpush1.msra.mxu0 0.0
    %804 = vmatprep.subr.mxu0 0.0
    %805 = vmatpush1.msra.mxu0 0.0
    %806 = vmatprep.subr.mxu0 0.0
    %807 = vmatpush1.msra.mxu0 0.0
    %808 = vmatprep.subr.mxu0 0.0
    %809 = vmatpush1.msra.mxu0 0.0
    %810 = vmatprep.subr.mxu0 0.0
    %811 = vmatpush1.msra.mxu0 0.0
    %812 = vmatprep.subr.mxu0 0.0
    %813 = vmatpush1.msra.mxu0 0.0
    %814 = vmatprep.subr.mxu0 0.0
    %815 = vmatpush1.msra.mxu0 0.0
    %816 = vmatprep.subr.mxu0 0.0
    %817 = vmatpush1.msra.mxu0 0.0
    %818 = vmatprep.subr.mxu0 0.0
    %819 = vmatpush1.msra.mxu0 0.0
    %820 = vmatprep.subr.mxu0 0.0
    %821 = vmatpush1.msra.mxu0 0.0
    %822 = vmatprep.subr.mxu0 0.0
    %823 = vmatpush1.msra.mxu0 0.0
    %824 = vmatprep.subr.mxu0 0.0
    %825 = vmatpush1.msra.mxu0 0.0
    %826 = vmatprep.subr.mxu0 0.0
    %827 = vmatpush1.msra.mxu0 0.0
    %828 = vmatprep.subr.mxu0 0.0
    %829 = vmatpush1.msra.mxu0 0.0
    %830 = vmatprep.subr.mxu0 0.0
    %831 = vmatpush1.msra.mxu0 0.0
    %832 = vmatprep.subr.mxu0 0.0
    %833 = vmatpush1.msra.mxu0 0.0
    %834 = vmatprep.subr.mxu0 0.0
    %835 = vmatpush1.msra.mxu0 0.0
    %836 = vmatprep.subr.mxu0 0.0
    %837 = vmatpush1.msra.mxu0 0.0
    %838 = vmatprep.subr.mxu0 0.0
    %839 = vmatpush1.msra.mxu0 0.0
    %840 = vmatprep.subr.mxu0 0.0
    %841 = vmatpush1.msra.mxu0 0.0
    %842 = vmatprep.subr.mxu0 0.0
    %843 = vmatpush1.msra.mxu0 0.0
    %844 = vmatprep.subr.mxu0 0.0
    %845 = vmatpush1.msra.mxu0 0.0
    %846 = vmatprep.subr.mxu0 0.0
    %847 = vmatpush1.msra.mxu0 0.0
    %848 = vmatprep.subr.mxu0 0.0
    %849 = vmatpush1.msra.mxu0 0.0
    %850 = vmatprep.subr.mxu0 0.0
    %851 = vmatpush1.msra.mxu0 0.0
    %852 = vmatprep.subr.mxu0 0.0
    %853 = vmatpush1.msra.mxu0 0.0
    %854 = vmatprep.subr.mxu0 0.0
    %855 = vmatpush1.msra.mxu0 0.0
    %856 = vmatprep.mubr.f32.mxu0 0.0
    %857 = vmatmul.mubr.f32.gmra.mrb[0].mxu0 %v790
    %v858 = vpop.f32.mrb[0].mxu0
    %v859 = vadd.f32 0.0, %v858
    %v860 = vpop.f32.mrb[0].mxu0
    %861 = vdwg.mxu0
    %863 = vset.pattern.permute.xlu0 0
    %864 = vperm.xlu0 %863, %v691
    %v865 = vpop.permute.xlu0 %864
    %v866 = vlaneseq
    %v867 = vshrl.u32 %v866, 7
    %v868 = vsub.s32 %v453, %v867
    %v869 = vrot.slane %v865, %v868
    %v870 = vsel %vm501, %v869, 0
    %872 = vmatprep.subr.mxu0 0.0
    %873 = vmatpush1.msra.mxu0 %v73
    %874 = vmatprep.subr.mxu0 0.0
    %875 = vmatpush1.msra.mxu0 0.0
    %876 = vmatprep.subr.mxu0 0.0
    %877 = vmatpush1.msra.mxu0 0.0
    %878 = vmatprep.subr.mxu0 0.0
    %879 = vmatpush1.msra.mxu0 0.0
    %880 = vmatprep.subr.mxu0 0.0
    %881 = vmatpush1.msra.mxu0 0.0
    %882 = vmatprep.subr.mxu0 0.0
    %883 = vmatpush1.msra.mxu0 0.0
    %884 = vmatprep.subr.mxu0 0.0
    %885 = vmatpush1.msra.mxu0 0.0
    %886 = vmatprep.subr.mxu0 0.0
    %887 = vmatpush1.msra.mxu0 0.0
    %888 = vmatprep.subr.mxu0 0.0
    %889 = vmatpush1.msra.mxu0 0.0
    %890 = vmatprep.subr.mxu0 0.0
    %891 = vmatpush1.msra.mxu0 0.0
    %892 = vmatprep.subr.mxu0 0.0
    %893 = vmatpush1.msra.mxu0 0.0
    %894 = vmatprep.subr.mxu0 0.0
    %895 = vmatpush1.msra.mxu0 0.0
    %896 = vmatprep.subr.mxu0 0.0
    %897 = vmatpush1.msra.mxu0 0.0
    %898 = vmatprep.subr.mxu0 0.0
    %899 = vmatpush1.msra.mxu0 0.0
    %900 = vmatprep.subr.mxu0 0.0
    %901 = vmatpush1.msra.mxu0 0.0
    %902 = vmatprep.subr.mxu0 0.0
    %903 = vmatpush1.msra.mxu0 0.0
    %904 = vmatprep.subr.mxu0 0.0
    %905 = vmatpush1.msra.mxu0 0.0
    %906 = vmatprep.subr.mxu0 0.0
    %907 = vmatpush1.msra.mxu0 0.0
    %908 = vmatprep.subr.mxu0 0.0
    %909 = vmatpush1.msra.mxu0 0.0
    %910 = vmatprep.subr.mxu0 0.0
    %911 = vmatpush1.msra.mxu0 0.0
    %912 = vmatprep.subr.mxu0 0.0
    %913 = vmatpush1.msra.mxu0 0.0
    %914 = vmatprep.subr.mxu0 0.0
    %915 = vmatpush1.msra.mxu0 0.0
    %916 = vmatprep.subr.mxu0 0.0
    %917 = vmatpush1.msra.mxu0 0.0
    %918 = vmatprep.subr.mxu0 0.0
    %919 = vmatpush1.msra.mxu0 0.0
    %920 = vmatprep.subr.mxu0 0.0
    %921 = vmatpush1.msra.mxu0 0.0
    %922 = vmatprep.subr.mxu0 0.0
    %923 = vmatpush1.msra.mxu0 0.0
    %924 = vmatprep.subr.mxu0 0.0
    %925 = vmatpush1.msra.mxu0 0.0
    %926 = vmatprep.subr.mxu0 0.0
    %927 = vmatpush1.msra.mxu0 0.0
    %928 = vmatprep.subr.mxu0 0.0
    %929 = vmatpush1.msra.mxu0 0.0
    %930 = vmatprep.subr.mxu0 0.0
    %931 = vmatpush1.msra.mxu0 0.0
    %932 = vmatprep.subr.mxu0 0.0
    %933 = vmatpush1.msra.mxu0 0.0
    %934 = vmatprep.subr.mxu0 0.0
    %935 = vmatpush1.msra.mxu0 0.0
    %936 = vmatprep.mubr.f32.mxu0 0.0
    %937 = vmatmul.mubr.f32.gmra.mrb[0].mxu0 %v870
    %v938 = vpop.f32.mrb[0].mxu0
    %v939 = vadd.f32 0.0, %v938
    %v940 = vpop.f32.mrb[0].mxu0
    %941 = vdwg.mxu0
    %943 = vset.pattern.permute.xlu0 0
    %944 = vperm.xlu0 %943, %v693
    %v945 = vpop.permute.xlu0 %944
    %v946 = vlaneseq
    %v947 = vshrl.u32 %v946, 7
    %v948 = vsub.s32 %v453, %v947
    %v949 = vrot.slane %v945, %v948
    %v950 = vsel %vm501, %v949, 0
    %952 = vmatprep.subr.mxu0 0.0
    %953 = vmatpush1.msra.mxu0 %v74
    %954 = vmatprep.subr.mxu0 0.0
    %955 = vmatpush1.msra.mxu0 0.0
    %956 = vmatprep.subr.mxu0 0.0
    %957 = vmatpush1.msra.mxu0 0.0
    %958 = vmatprep.subr.mxu0 0.0
    %959 = vmatpush1.msra.mxu0 0.0
    %960 = vmatprep.subr.mxu0 0.0
    %961 = vmatpush1.msra.mxu0 0.0
    %962 = vmatprep.subr.mxu0 0.0
    %963 = vmatpush1.msra.mxu0 0.0
    %964 = vmatprep.subr.mxu0 0.0
    %965 = vmatpush1.msra.mxu0 0.0
    %966 = vmatprep.subr.mxu0 0.0
    %967 = vmatpush1.msra.mxu0 0.0
    %968 = vmatprep.subr.mxu0 0.0
    %969 = vmatpush1.msra.mxu0 0.0
    %970 = vmatprep.subr.mxu0 0.0
    %971 = vmatpush1.msra.mxu0 0.0
    %972 = vmatprep.subr.mxu0 0.0
    %973 = vmatpush1.msra.mxu0 0.0
    %974 = vmatprep.subr.mxu0 0.0
    %975 = vmatpush1.msra.mxu0 0.0
    %976 = vmatprep.subr.mxu0 0.0
    %977 = vmatpush1.msra.mxu0 0.0
    %978 = vmatprep.subr.mxu0 0.0
    %979 = vmatpush1.msra.mxu0 0.0
    %980 = vmatprep.subr.mxu0 0.0
    %981 = vmatpush1.msra.mxu0 0.0
    %982 = vmatprep.subr.mxu0 0.0
    %983 = vmatpush1.msra.mxu0 0.0
    %984 = vmatprep.subr.mxu0 0.0
    %985 = vmatpush1.msra.mxu0 0.0
    %986 = vmatprep.subr.mxu0 0.0
    %987 = vmatpush1.msra.mxu0 0.0
    %988 = vmatprep.subr.mxu0 0.0
    %989 = vmatpush1.msra.mxu0 0.0
    %990 = vmatprep.subr.mxu0 0.0
    %991 = vmatpush1.msra.mxu0 0.0
    %992 = vmatprep.subr.mxu0 0.0
    %993 = vmatpush1.msra.mxu0 0.0
    %994 = vmatprep.subr.mxu0 0.0
    %995 = vmatpush1.msra.mxu0 0.0
    %996 = vmatprep.subr.mxu0 0.0
    %997 = vmatpush1.msra.mxu0 0.0
    %998 = vmatprep.subr.mxu0 0.0
    %999 = vmatpush1.msra.mxu0 0.0
    %1000 = vmatprep.subr.mxu0 0.0
    %1001 = vmatpush1.msra.mxu0 0.0
    %1002 = vmatprep.subr.mxu0 0.0
    %1003 = vmatpush1.msra.mxu0 0.0
    %1004 = vmatprep.subr.mxu0 0.0
    %1005 = vmatpush1.msra.mxu0 0.0
    %1006 = vmatprep.subr.mxu0 0.0
    %1007 = vmatpush1.msra.mxu0 0.0
    %1008 = vmatprep.subr.mxu0 0.0
    %1009 = vmatpush1.msra.mxu0 0.0
    %1010 = vmatprep.subr.mxu0 0.0
    %1011 = vmatpush1.msra.mxu0 0.0
    %1012 = vmatprep.subr.mxu0 0.0
    %1013 = vmatpush1.msra.mxu0 0.0
    %1014 = vmatprep.subr.mxu0 0.0
    %1015 = vmatpush1.msra.mxu0 0.0
    %1016 = vmatprep.mubr.f32.mxu0 0.0
    %1017 = vmatmul.mubr.f32.gmra.mrb[0].mxu0 %v950
    %v1018 = vpop.f32.mrb[0].mxu0
    %v1019 = vadd.f32 0.0, %v1018
    %v1020 = vpop.f32.mrb[0].mxu0
    %1021 = vdwg.mxu0
    %1023 = vset.pattern.permute.xlu0 0
    %1024 = vperm.xlu0 %1023, %v695
    %v1025 = vpop.permute.xlu0 %1024
    %v1026 = vlaneseq
    %v1027 = vshrl.u32 %v1026, 7
    %v1028 = vsub.s32 %v453, %v1027
    %v1029 = vrot.slane %v1025, %v1028
    %v1030 = vsel %vm501, %v1029, 0
    %1032 = vmatprep.subr.mxu0 0.0
    %1033 = vmatpush1.msra.mxu0 %v75
    %1034 = vmatprep.subr.mxu0 0.0
    %1035 = vmatpush1.msra.mxu0 0.0
    %1036 = vmatprep.subr.mxu0 0.0
    %1037 = vmatpush1.msra.mxu0 0.0
    %1038 = vmatprep.subr.mxu0 0.0
    %1039 = vmatpush1.msra.mxu0 0.0
    %1040 = vmatprep.subr.mxu0 0.0
    %1041 = vmatpush1.msra.mxu0 0.0
    %1042 = vmatprep.subr.mxu0 0.0
    %1043 = vmatpush1.msra.mxu0 0.0
    %1044 = vmatprep.subr.mxu0 0.0
    %1045 = vmatpush1.msra.mxu0 0.0
    %1046 = vmatprep.subr.mxu0 0.0
    %1047 = vmatpush1.msra.mxu0 0.0
    %1048 = vmatprep.subr.mxu0 0.0
    %1049 = vmatpush1.msra.mxu0 0.0
    %1050 = vmatprep.subr.mxu0 0.0
    %1051 = vmatpush1.msra.mxu0 0.0
    %1052 = vmatprep.subr.mxu0 0.0
    %1053 = vmatpush1.msra.mxu0 0.0
    %1054 = vmatprep.subr.mxu0 0.0
    %1055 = vmatpush1.msra.mxu0 0.0
    %1056 = vmatprep.subr.mxu0 0.0
    %1057 = vmatpush1.msra.mxu0 0.0
    %1058 = vmatprep.subr.mxu0 0.0
    %1059 = vmatpush1.msra.mxu0 0.0
    %1060 = vmatprep.subr.mxu0 0.0
    %1061 = vmatpush1.msra.mxu0 0.0
    %1062 = vmatprep.subr.mxu0 0.0
    %1063 = vmatpush1.msra.mxu0 0.0
    %1064 = vmatprep.subr.mxu0 0.0
    %1065 = vmatpush1.msra.mxu0 0.0
    %1066 = vmatprep.subr.mxu0 0.0
    %1067 = vmatpush1.msra.mxu0 0.0
    %1068 = vmatprep.subr.mxu0 0.0
    %1069 = vmatpush1.msra.mxu0 0.0
    %1070 = vmatprep.subr.mxu0 0.0
    %1071 = vmatpush1.msra.mxu0 0.0
    %1072 = vmatprep.subr.mxu0 0.0
    %1073 = vmatpush1.msra.mxu0 0.0
    %1074 = vmatprep.subr.mxu0 0.0
    %1075 = vmatpush1.msra.mxu0 0.0
    %1076 = vmatprep.subr.mxu0 0.0
    %1077 = vmatpush1.msra.mxu0 0.0
    %1078 = vmatprep.subr.mxu0 0.0
    %1079 = vmatpush1.msra.mxu0 0.0
    %1080 = vmatprep.subr.mxu0 0.0
    %1081 = vmatpush1.msra.mxu0 0.0
    %1082 = vmatprep.subr.mxu0 0.0
    %1083 = vmatpush1.msra.mxu0 0.0
    %1084 = vmatprep.subr.mxu0 0.0
    %1085 = vmatpush1.msra.mxu0 0.0
    %1086 = vmatprep.subr.mxu0 0.0
    %1087 = vmatpush1.msra.mxu0 0.0
    %1088 = vmatprep.subr.mxu0 0.0
    %1089 = vmatpush1.msra.mxu0 0.0
    %1090 = vmatprep.subr.mxu0 0.0
    %1091 = vmatpush1.msra.mxu0 0.0
    %1092 = vmatprep.subr.mxu0 0.0
    %1093 = vmatpush1.msra.mxu0 0.0
    %1094 = vmatprep.subr.mxu0 0.0
    %1095 = vmatpush1.msra.mxu0 0.0
    %1096 = vmatprep.mubr.f32.mxu0 0.0
    %1097 = vmatmul.mubr.f32.gmra.mrb[0].mxu0 %v1030
    %v1098 = vpop.f32.mrb[0].mxu0
    %v1099 = vadd.f32 0.0, %v1098
    %v1100 = vpop.f32.mrb[0].mxu0
    %1101 = vdwg.mxu0
    %1103 = vset.pattern.permute.xlu0 0
    %1104 = vperm.xlu0 %1103, %v697
    %v1105 = vpop.permute.xlu0 %1104
    %v1106 = vlaneseq
    %v1107 = vshrl.u32 %v1106, 7
    %v1108 = vsub.s32 %v453, %v1107
    %v1109 = vrot.slane %v1105, %v1108
    %v1110 = vsel %vm501, %v1109, 0
    %1112 = vmatprep.subr.mxu0 0.0
    %1113 = vmatpush1.msra.mxu0 %v76
    %1114 = vmatprep.subr.mxu0 0.0
    %1115 = vmatpush1.msra.mxu0 0.0
    %1116 = vmatprep.subr.mxu0 0.0
    %1117 = vmatpush1.msra.mxu0 0.0
    %1118 = vmatprep.subr.mxu0 0.0
    %1119 = vmatpush1.msra.mxu0 0.0
    %1120 = vmatprep.subr.mxu0 0.0
    %1121 = vmatpush1.msra.mxu0 0.0
    %1122 = vmatprep.subr.mxu0 0.0
    %1123 = vmatpush1.msra.mxu0 0.0
    %1124 = vmatprep.subr.mxu0 0.0
    %1125 = vmatpush1.msra.mxu0 0.0
    %1126 = vmatprep.subr.mxu0 0.0
    %1127 = vmatpush1.msra.mxu0 0.0
    %1128 = vmatprep.subr.mxu0 0.0
    %1129 = vmatpush1.msra.mxu0 0.0
    %1130 = vmatprep.subr.mxu0 0.0
    %1131 = vmatpush1.msra.mxu0 0.0
    %1132 = vmatprep.subr.mxu0 0.0
    %1133 = vmatpush1.msra.mxu0 0.0
    %1134 = vmatprep.subr.mxu0 0.0
    %1135 = vmatpush1.msra.mxu0 0.0
    %1136 = vmatprep.subr.mxu0 0.0
    %1137 = vmatpush1.msra.mxu0 0.0
    %1138 = vmatprep.subr.mxu0 0.0
    %1139 = vmatpush1.msra.mxu0 0.0
    %1140 = vmatprep.subr.mxu0 0.0
    %1141 = vmatpush1.msra.mxu0 0.0
    %1142 = vmatprep.subr.mxu0 0.0
    %1143 = vmatpush1.msra.mxu0 0.0
    %1144 = vmatprep.subr.mxu0 0.0
    %1145 = vmatpush1.msra.mxu0 0.0
    %1146 = vmatprep.subr.mxu0 0.0
    %1147 = vmatpush1.msra.mxu0 0.0
    %1148 = vmatprep.subr.mxu0 0.0
    %1149 = vmatpush1.msra.mxu0 0.0
    %1150 = vmatprep.subr.mxu0 0.0
    %1151 = vmatpush1.msra.mxu0 0.0
    %1152 = vmatprep.subr.mxu0 0.0
    %1153 = vmatpush1.msra.mxu0 0.0
    %1154 = vmatprep.subr.mxu0 0.0
    %1155 = vmatpush1.msra.mxu0 0.0
    %1156 = vmatprep.subr.mxu0 0.0
    %1157 = vmatpush1.msra.mxu0 0.0
    %1158 = vmatprep.subr.mxu0 0.0
    %1159 = vmatpush1.msra.mxu0 0.0
    %1160 = vmatprep.subr.mxu0 0.0
    %1161 = vmatpush1.msra.mxu0 0.0
    %1162 = vmatprep.subr.mxu0 0.0
    %1163 = vmatpush1.msra.mxu0 0.0
    %1164 = vmatprep.subr.mxu0 0.0
    %1165 = vmatpush1.msra.mxu0 0.0
    %1166 = vmatprep.subr.mxu0 0.0
    %1167 = vmatpush1.msra.mxu0 0.0
    %1168 = vmatprep.subr.mxu0 0.0
    %1169 = vmatpush1.msra.mxu0 0.0
    %1170 = vmatprep.subr.mxu0 0.0
    %1171 = vmatpush1.msra.mxu0 0.0
    %1172 = vmatprep.subr.mxu0 0.0
    %1173 = vmatpush1.msra.mxu0 0.0
    %1174 = vmatprep.subr.mxu0 0.0
    %1175 = vmatpush1.msra.mxu0 0.0
    %1176 = vmatprep.mubr.f32.mxu0 0.0
    %1177 = vmatmul.mubr.f32.gmra.mrb[0].mxu0 %v1110
    %v1178 = vpop.f32.mrb[0].mxu0
    %v1179 = vadd.f32 0.0, %v1178
    %v1180 = vpop.f32.mrb[0].mxu0
    %1181 = vdwg.mxu0
    %1183 = vset.pattern.permute.xlu0 0
    %1184 = vperm.xlu0 %1183, %v699
    %v1185 = vpop.permute.xlu0 %1184
    %v1186 = vlaneseq
    %v1187 = vshrl.u32 %v1186, 7
    %v1188 = vsub.s32 %v453, %v1187
    %v1189 = vrot.slane %v1185, %v1188
    %v1190 = vsel %vm501, %v1189, 0
    %1192 = vmatprep.subr.mxu0 0.0
    %1193 = vmatpush1.msra.mxu0 %v77
    %1194 = vmatprep.subr.mxu0 0.0
    %1195 = vmatpush1.msra.mxu0 0.0
    %1196 = vmatprep.subr.mxu0 0.0
    %1197 = vmatpush1.msra.mxu0 0.0
    %1198 = vmatprep.subr.mxu0 0.0
    %1199 = vmatpush1.msra.mxu0 0.0
    %1200 = vmatprep.subr.mxu0 0.0
    %1201 = vmatpush1.msra.mxu0 0.0
    %1202 = vmatprep.subr.mxu0 0.0
    %1203 = vmatpush1.msra.mxu0 0.0
    %1204 = vmatprep.subr.mxu0 0.0
    %1205 = vmatpush1.msra.mxu0 0.0
    %1206 = vmatprep.subr.mxu0 0.0
    %1207 = vmatpush1.msra.mxu0 0.0
    %1208 = vmatprep.subr.mxu0 0.0
    %1209 = vmatpush1.msra.mxu0 0.0
    %1210 = vmatprep.subr.mxu0 0.0
    %1211 = vmatpush1.msra.mxu0 0.0
    %1212 = vmatprep.subr.mxu0 0.0
    %1213 = vmatpush1.msra.mxu0 0.0
    %1214 = vmatprep.subr.mxu0 0.0
    %1215 = vmatpush1.msra.mxu0 0.0
    %1216 = vmatprep.subr.mxu0 0.0
    %1217 = vmatpush1.msra.mxu0 0.0
    %1218 = vmatprep.subr.mxu0 0.0
    %1219 = vmatpush1.msra.mxu0 0.0
    %1220 = vmatprep.subr.mxu0 0.0
    %1221 = vmatpush1.msra.mxu0 0.0
    %1222 = vmatprep.subr.mxu0 0.0
    %1223 = vmatpush1.msra.mxu0 0.0
    %1224 = vmatprep.subr.mxu0 0.0
    %1225 = vmatpush1.msra.mxu0 0.0
    %1226 = vmatprep.subr.mxu0 0.0
    %1227 = vmatpush1.msra.mxu0 0.0
    %1228 = vmatprep.subr.mxu0 0.0
    %1229 = vmatpush1.msra.mxu0 0.0
    %1230 = vmatprep.subr.mxu0 0.0
    %1231 = vmatpush1.msra.mxu0 0.0
    %1232 = vmatprep.subr.mxu0 0.0
    %1233 = vmatpush1.msra.mxu0 0.0
    %1234 = vmatprep.subr.mxu0 0.0
    %1235 = vmatpush1.msra.mxu0 0.0
    %1236 = vmatprep.subr.mxu0 0.0
    %1237 = vmatpush1.msra.mxu0 0.0
    %1238 = vmatprep.subr.mxu0 0.0
    %1239 = vmatpush1.msra.mxu0 0.0
    %1240 = vmatprep.subr.mxu0 0.0
    %1241 = vmatpush1.msra.mxu0 0.0
    %1242 = vmatprep.subr.mxu0 0.0
    %1243 = vmatpush1.msra.mxu0 0.0
    %1244 = vmatprep.subr.mxu0 0.0
    %1245 = vmatpush1.msra.mxu0 0.0
    %1246 = vmatprep.subr.mxu0 0.0
    %1247 = vmatpush1.msra.mxu0 0.0
    %1248 = vmatprep.subr.mxu0 0.0
    %1249 = vmatpush1.msra.mxu0 0.0
    %1250 = vmatprep.subr.mxu0 0.0
    %1251 = vmatpush1.msra.mxu0 0.0
    %1252 = vmatprep.subr.mxu0 0.0
    %1253 = vmatpush1.msra.mxu0 0.0
    %1254 = vmatprep.subr.mxu0 0.0
    %1255 = vmatpush1.msra.mxu0 0.0
    %1256 = vmatprep.mubr.f32.mxu0 0.0
    %1257 = vmatmul.mubr.f32.gmra.mrb[0].mxu0 %v1190
    %v1258 = vpop.f32.mrb[0].mxu0
    %v1259 = vadd.f32 0.0, %v1258
    %v1260 = vpop.f32.mrb[0].mxu0
    %1261 = vdwg.mxu0
    %1263 = vset.pattern.permute.xlu0 0
    %1264 = vperm.xlu0 %1263, %v701
    %v1265 = vpop.permute.xlu0 %1264
    %v1266 = vlaneseq
    %v1267 = vshrl.u32 %v1266, 7
    %v1268 = vsub.s32 %v453, %v1267
    %v1269 = vrot.slane %v1265, %v1268
    %v1270 = vsel %vm501, %v1269, 0
    %1272 = vmatprep.subr.mxu0 0.0
    %1273 = vmatpush1.msra.mxu0 %v78
    %1274 = vmatprep.subr.mxu0 0.0
    %1275 = vmatpush1.msra.mxu0 0.0
    %1276 = vmatprep.subr.mxu0 0.0
    %1277 = vmatpush1.msra.mxu0 0.0
    %1278 = vmatprep.subr.mxu0 0.0
    %1279 = vmatpush1.msra.mxu0 0.0
    %1280 = vmatprep.subr.mxu0 0.0
    %1281 = vmatpush1.msra.mxu0 0.0
    %1282 = vmatprep.subr.mxu0 0.0
    %1283 = vmatpush1.msra.mxu0 0.0
    %1284 = vmatprep.subr.mxu0 0.0
    %1285 = vmatpush1.msra.mxu0 0.0
    %1286 = vmatprep.subr.mxu0 0.0
    %1287 = vmatpush1.msra.mxu0 0.0
    %1288 = vmatprep.subr.mxu0 0.0
    %1289 = vmatpush1.msra.mxu0 0.0
    %1290 = vmatprep.subr.mxu0 0.0
    %1291 = vmatpush1.msra.mxu0 0.0
    %1292 = vmatprep.subr.mxu0 0.0
    %1293 = vmatpush1.msra.mxu0 0.0
    %1294 = vmatprep.subr.mxu0 0.0
    %1295 = vmatpush1.msra.mxu0 0.0
    %1296 = vmatprep.subr.mxu0 0.0
    %1297 = vmatpush1.msra.mxu0 0.0
    %1298 = vmatprep.subr.mxu0 0.0
    %1299 = vmatpush1.msra.mxu0 0.0
    %1300 = vmatprep.subr.mxu0 0.0
    %1301 = vmatpush1.msra.mxu0 0.0
    %1302 = vmatprep.subr.mxu0 0.0
    %1303 = vmatpush1.msra.mxu0 0.0
    %1304 = vmatprep.subr.mxu0 0.0
    %1305 = vmatpush1.msra.mxu0 0.0
    %1306 = vmatprep.subr.mxu0 0.0
    %1307 = vmatpush1.msra.mxu0 0.0
    %1308 = vmatprep.subr.mxu0 0.0
    %1309 = vmatpush1.msra.mxu0 0.0
    %1310 = vmatprep.subr.mxu0 0.0
    %1311 = vmatpush1.msra.mxu0 0.0
    %1312 = vmatprep.subr.mxu0 0.0
    %1313 = vmatpush1.msra.mxu0 0.0
    %1314 = vmatprep.subr.mxu0 0.0
    %1315 = vmatpush1.msra.mxu0 0.0
    %1316 = vmatprep.subr.mxu0 0.0
    %1317 = vmatpush1.msra.mxu0 0.0
    %1318 = vmatprep.subr.mxu0 0.0
    %1319 = vmatpush1.msra.mxu0 0.0
    %1320 = vmatprep.subr.mxu0 0.0
    %1321 = vmatpush1.msra.mxu0 0.0
    %1322 = vmatprep.subr.mxu0 0.0
    %1323 = vmatpush1.msra.mxu0 0.0
    %1324 = vmatprep.subr.mxu0 0.0
    %1325 = vmatpush1.msra.mxu0 0.0
    %1326 = vmatprep.subr.mxu0 0.0
    %1327 = vmatpush1.msra.mxu0 0.0
    %1328 = vmatprep.subr.mxu0 0.0
    %1329 = vmatpush1.msra.mxu0 0.0
    %1330 = vmatprep.subr.mxu0 0.0
    %1331 = vmatpush1.msra.mxu0 0.0
    %1332 = vmatprep.subr.mxu0 0.0
    %1333 = vmatpush1.msra.mxu0 0.0
    %1334 = vmatprep.subr.mxu0 0.0
    %1335 = vmatpush1.msra.mxu0 0.0
    %1336 = vmatprep.mubr.f32.mxu0 0.0
    %1337 = vmatmul.mubr.f32.gmra.mrb[0].mxu0 %v1270
    %v1338 = vpop.f32.mrb[0].mxu0
    %v1339 = vadd.f32 0.0, %v1338
    %v1340 = vpop.f32.mrb[0].mxu0
    %1341 = vdwg.mxu0
    %v1342 = vmul.f32 %v779, %v779
    %v1343 = vmul.f32 %v859, %v859
    %v1344 = vmul.f32 %v939, %v939
    %v1345 = vmul.f32 %v1019, %v1019
    %v1346 = vmul.f32 %v1099, %v1099
    %v1347 = vmul.f32 %v1179, %v1179
    %v1348 = vmul.f32 %v1259, %v1259
    %v1349 = vmul.f32 %v1339, %v1339
    %v1358 = vrot.slane %v1343, 7
    %v1359 = vsel %vm486, %v1358, %v1342
    %v1360 = vrot.slane %v1344, 6
    %v1361 = vsel %vm488, %v1360, %v1359
    %v1362 = vrot.slane %v1345, 5
    %v1363 = vsel %vm490, %v1362, %v1361
    %v1364 = vrot.slane %v1346, 4
    %v1365 = vsel %vm492, %v1364, %v1363
    %v1366 = vrot.slane %v1347, 3
    %v1367 = vsel %vm494, %v1366, %v1365
    %v1368 = vrot.slane %v1348, 2
    %v1369 = vsel %vm496, %v1368, %v1367
    %v1370 = vrot.slane %v1349, 1
    %v1371 = vsel %vm498, %v1370, %v1369
    %v1373 = vsel %vm91, %v1371, 0.0
    %1374 = vadd.xlane.f32.xlu0 %v1373
    %v1375 = vpop.xlane.xlu0 %1374
    %v1376 = vadd.f32 %v1375, 1e-08
    %v1377 = vrsqrt.pop %v1376
    %v1378 = vmul.f32 %v1376, %v1377
    %vm1379 = vcmp.eq.f32.partialorder %v1376, inf
    %v1380 = vsel %vm1379, %v1376, %v1378
    %vm1381 = vcmp.eq.f32.partialorder %v1376, 0.0
    %v1382 = vand.u32 %v1376, 2147483648
    %v1383 = vsel %vm1381, %v1382, %v1380
    %v1384 = vadd.f32 %v1383, 1e-08
    %v1386 = vrot.slane %v1384, 1
    %v1387 = vrot.slane %v1384, 2
    %v1388 = vrot.slane %v1384, 3
    %v1389 = vrot.slane %v1384, 4
    %v1390 = vrot.slane %v1384, 5
    %v1391 = vrot.slane %v1384, 6
    %v1392 = vrot.slane %v1384, 7
    %v1401 = vrcp.pop %v1384
    %v1402 = vmul.f32 %v779, %v1401
    %v1403 = vrcp.pop %v1386
    %v1404 = vmul.f32 %v859, %v1403
    %v1405 = vrcp.pop %v1387
    %v1406 = vmul.f32 %v939, %v1405
    %v1407 = vrcp.pop %v1388
    %v1408 = vmul.f32 %v1019, %v1407
    %v1409 = vrcp.pop %v1389
    %v1410 = vmul.f32 %v1099, %v1409
    %v1411 = vrcp.pop %v1390
    %v1412 = vmul.f32 %v1179, %v1411
    %v1413 = vrcp.pop %v1391
    %v1414 = vmul.f32 %v1259, %v1413
    %v1415 = vrcp.pop %v1392
    %v1416 = vmul.f32 %v1339, %v1415
    %v1425 = vrot.slane %v1404, 7
    %v1426 = vsel %vm486, %v1425, %v1402
    %v1427 = vrot.slane %v1406, 6
    %v1428 = vsel %vm488, %v1427, %v1426
    %v1429 = vrot.slane %v1408, 5
    %v1430 = vsel %vm490, %v1429, %v1428
    %v1431 = vrot.slane %v1410, 4
    %v1432 = vsel %vm492, %v1431, %v1430
    %v1433 = vrot.slane %v1412, 3
    %v1434 = vsel %vm494, %v1433, %v1432
    %v1435 = vrot.slane %v1414, 2
    %v1436 = vsel %vm496, %v1435, %v1434
    %v1437 = vrot.slane %v1416, 1
    %v1438 = vsel %vm498, %v1437, %v1436
    %1440 = vst.msk [vmem:[#allocation8] sm:$0xff] %vm91, %v1438
    %v1441 = vsel %vm486, %v789, %v709
    %v1442 = vsel %vm488, %v869, %v1441
    %v1443 = vsel %vm490, %v949, %v1442
    %v1444 = vsel %vm492, %v1029, %v1443
    %v1445 = vsel %vm494, %v1109, %v1444
    %v1446 = vsel %vm496, %v1189, %v1445
    %v1447 = vsel %vm498, %v1269, %v1446
    %1449 = vst.msk [vmem:[#allocation9] sm:$0xff] %vm501, %v1447
    // Predicated region
    $region42: #{tpu_custom_call.1} parent=1 // pred_check
      _
    $region43: #{tpu_custom_call.1} parent=1 // pred_check_branch
      %1451 = sbr.rel (0) target = $region45
    $region44: #{tpu_custom_call.1} parent=1 // pred_region
      %s1453 = ssub.s32 128, 32
      %1454 = vsyncadd [#allocation4], %s1453
      %s1455 = sshll.u32 [#allocation8], 4
      %s1456 = int_to_ptr.vmem [resolvable:$true] %s1455
      %1461 = dma.vmem_to_hbm [thread:$0]  %s1456, 32, %s7, [#allocation4], 32, 32, 2
    $region45: #{tpu_custom_call.1} parent=1 // pred_fallthru
      _
    // Predicated region
    $region46: #{tpu_custom_call.1} parent=1 // pred_check
      _
    $region47: #{tpu_custom_call.1} parent=1 // pred_check_branch
      %1463 = sbr.rel (0) target = $region49
    $region48: #{tpu_custom_call.1} parent=1 // pred_region
      %s1465 = ssub.s32 128, 32
      %1466 = vsyncadd [#allocation10], %s1465
      %s1467 = sshll.u32 [#allocation9], 4
      %s1468 = int_to_ptr.vmem [resolvable:$true] %s1467
      %1473 = dma.vmem_to_hbm [thread:$0]  %s1468, 32, %s8, [#allocation10], 32, 32, 2
    $region49: #{tpu_custom_call.1} parent=1 // pred_fallthru
      _
    // Predicated region
    $region50: #{tpu_custom_call.1} parent=1 // pred_check
      _
    $region51: #{tpu_custom_call.1} parent=1 // pred_check_branch
      %1475 = sbr.rel (0) target = $region53
    $region52: #{tpu_custom_call.1} parent=1 // pred_region
      %1476 = dma.done [#allocation4], 128
    $region53: #{tpu_custom_call.1} parent=1 // pred_fallthru
      _
    // Predicated region
    $region54: #{tpu_custom_call.1} parent=1 // pred_check
      _
    $region55: #{tpu_custom_call.1} parent=1 // pred_check_branch
      %1478 = sbr.rel (0) target = $region57
    $region56: #{tpu_custom_call.1} parent=1 // pred_region
      %1479 = dma.done [#allocation10], 128
    $region57: #{tpu_custom_call.1} parent=1 // pred_fallthru
      _
    %1480 = vsyncpa [#allocation3], 1
    %1481 = vsyncpa [#allocation6], 1
    %1482 = vsyncpa [#allocation4], 1
    %1483 = vsyncpa [#allocation10], 1

</llo_original>
